<compile_context>
chip_gen: v7x
topology: tpu7x:2x2x1
jax: 0.10.0
libtpu: 0.0.40
codegen_flags: <defaults>
</compile_context>

<pallas_src>
import functools

import jax
import jax.numpy as jnp
from jax import lax
from jax.experimental import pallas as pl
from jax.experimental.pallas import tpu as pltpu


# ----------------------------------------------------------------------------
# Fused kernel: expand + depthwise + project (+ residual), one row tile / step
# ----------------------------------------------------------------------------
def _inverted_residual_kernel(*refs, W, TW, halo, hidden_dim,
                              has_expand, use_res):
    if has_expand:
        (x_ref, xh_ref, m_ref, we_ref, b1_ref, wdw_ref, b2_ref,
         wp_ref, b3_ref, o_ref, hbuf_ref) = refs
    else:
        (x_ref, xh_ref, m_ref, wdw_ref, b2_ref,
         wp_ref, b3_ref, o_ref, hbuf_ref) = refs

    r = pl.program_id(1)
    last = pl.num_programs(1) - 1

    def expand(xs):
        """1x1 expand conv (BN scale folded into weights) + ReLU6 -> f32."""
        if has_expand:
            h = jnp.dot(we_ref[...], xs, preferred_element_type=jnp.float32)
            return jnp.clip(h + b1_ref[...], 0.0, 6.0)
        return xs.astype(jnp.float32)          # expand_ratio == 1: hidden==inp

    # ---- hidden activation for this tile + one halo row above/below --------
    # hbuf layout along the flattened pixel axis:
    #   [ unused | corner | row above | TH interior rows | row below | corner |
    #     unused ]                               (interior starts at `halo`)
    # Every location the 9 taps can read is rewritten every step, so the
    # scratch needs NO zero-init and cannot leak state across steps / images.
    x_tile = x_ref[0]                                        # (inp, TW)
    hbuf_ref[:, halo:halo + TW] = expand(x_tile)

    halo_rows = expand(xh_ref[0, 0])                         # (hidden, 2W)
    top_valid = (r > 0).astype(jnp.float32)       # image top -> zero padding
    bot_valid = (r < last).astype(jnp.float32)    # image bottom -> zero pad
    hbuf_ref[:, halo - W:halo] = halo_rows[:, :W] * top_valid
    hbuf_ref[:, halo + TW:halo + TW + W] = halo_rows[:, W:] * bot_valid

    # Corner lanes are only ever read by masked taps; keep them finite zeros
    # (uninitialized VMEM could hold NaN and 0*NaN = NaN).
    zero_col = jnp.zeros((hidden_dim, 1), jnp.float32)
    hbuf_ref[:, halo - W - 1:halo - W] = zero_col
    hbuf_ref[:, halo + TW + W:halo + TW + W + 1] = zero_col

    # ---- 3x3 depthwise conv (pad=1).  Taps are static-offset slices of the
    # haloed scratch; row-wrap taps are grouped by dx so each wrap mask is a
    # single multiply per group.  Stride 2 is handled by the wrapper.
    mask_l = m_ref[0:1, :]                                   # col > 0 valid
    mask_r = m_ref[1:2, :]                                   # col < W-1 valid

    def tap(dy, dx):
        off = halo + dy * W + dx
        return hbuf_ref[:, off:off + TW]                     # (hidden, TW)

    def w9(t):
        return wdw_ref[:, t:t + 1]                           # (hidden, 1)

    center = tap(-1, 0) * w9(1) + tap(0, 0) * w9(4) + tap(1, 0) * w9(7)
    left = tap(-1, -1) * w9(0) + tap(0, -1) * w9(3) + tap(1, -1) * w9(6)
    right = tap(-1, 1) * w9(2) + tap(0, 1) * w9(5) + tap(1, 1) * w9(8)
    # TODO(synk): build the +/-1 lane shifts with pltpu.roll (XLU) from the
    # three aligned dy windows when the kernel is load-slot bound.
    acc = center + left * mask_l + right * mask_r
    dw = jnp.clip(acc + b2_ref[...], 0.0, 6.0)

    # ---- 1x1 project (MXU, BN folded) + residual ----------------------------
    out = jnp.dot(wp_ref[...], dw.astype(wp_ref.dtype),
                  preferred_element_type=jnp.float32) + b3_ref[...]
    if use_res:
        out = out + x_tile.astype(jnp.float32)   # input tile still resident
    o_ref[0] = out.astype(o_ref.dtype)           # lane-dense store


# ----------------------------------------------------------------------------
# Wrapper
# ----------------------------------------------------------------------------
def _fold_bn(gamma, beta, mean, var, eps=1e-5):
    scale = gamma / jnp.sqrt(var + eps)
    bias = beta - mean * scale
    return scale.astype(jnp.float32), bias.astype(jnp.float32)


def _choose_row_tile(H, W, hidden, target_bytes=1 << 20):
    """Pick TH | H with (TH*W) % 128 == 0 (legal, lane-aligned blocks) and a
    ~1 MiB hidden tile; otherwise fall back to the whole image (block == full
    dim is always legal).  Preferring a proper divisor gives >=2 row tiles
    per image, i.e. several pipeline steps and work for both v7x cores."""
    max_rows = max(1, target_bytes // max(1, hidden * W * 4))
    th = H
    for cand in range(1, H):
        if H % cand == 0 and (cand * W) % 128 == 0 and cand <= max_rows:
            th = cand                     # keeps the largest qualifying divisor
    return th


def inverted_residual_forward(x_nchw, params, inp, oup, stride, expand_ratio,
                              act_dtype=jnp.bfloat16):
    assert stride in (1, 2)
    use_res = (stride == 1) and (inp == oup)
    has_expand = expand_ratio != 1
    hidden = params["hidden_dim"]
    if not has_expand:
        assert hidden == inp, (hidden, inp)   # depthwise runs on x directly

    n, _, H, W = x_nchw.shape
    S = H * W
    TH = _choose_row_tile(H, W, hidden)
    TW = TH * W
    R = H // TH
    halo = (W // 128 + 1) * 128            # >= W+1, interior stays lane-aligned

    # NCHW -> (N, C, H*W): pure reshape.  Activations / matmul weights go to
    # HBM in act_dtype (bf16 by default -> half the HBM traffic); all
    # accumulation inside the kernel is f32.
    x4 = x_nchw.astype(act_dtype)                           # (n, inp, H, W)
    x = x4.reshape(n, inp, S)

    # Per-tile halo rows (row above / row below each tile; zeros at the image
    # boundary are irrelevant - the kernel gates them on the tile index).
    # Tiny array -> every in-kernel slice stays static.
    zrow = jnp.zeros((n, inp, 1, W), act_dtype)
    top = jnp.concatenate([zrow, x4[:, :, TH - 1:H - 1:TH, :]], axis=2)
    bot = jnp.concatenate([x4[:, :, TH:H:TH, :], zrow], axis=2)
    x_halo = jnp.transpose(jnp.concatenate([top, bot], axis=-1),
                           (0, 2, 1, 3))                    # (n, R, inp, 2W)

    # Fold BN scale into the conv weights on the host; kernel only adds bias.
    s2, b2 = _fold_bn(*params["bn2"])
    s3, b3 = _fold_bn(*params["bn3"])
    wdw_ct = (params["w_dw"] * s2).reshape(9, hidden).T.astype(jnp.float32)
    wp_t = (params["w_proj"] * s3).T.astype(act_dtype)      # (oup, hidden)

    # Column-validity masks for the dx = -1 / +1 taps; identical for every row
    # tile since tiles start on row boundaries.
    col = jnp.arange(TW, dtype=jnp.int32) % W
    dwmask = jnp.stack([col > 0, col < W - 1]).astype(jnp.float32)  # (2, TW)

    args = [x, x_halo, dwmask]
    in_specs = [
        pl.BlockSpec((1, inp, TW), lambda i, r: (i, 0, r)),
        pl.BlockSpec((1, 1, inp, 2 * W), lambda i, r: (i, r, 0, 0)),
        pl.BlockSpec((2, TW), lambda i, r: (0, 0)),
    ]
    if has_expand:
        s1, b1 = _fold_bn(*params["bn1"])
        we_t = (params["w_expand"] * s1).T.astype(act_dtype)  # (hidden, inp)
        args += [we_t, b1.reshape(hidden, 1)]
        in_specs += [
            pl.BlockSpec((hidden, inp), lambda i, r: (0, 0)),
            pl.BlockSpec((hidden, 1), lambda i, r: (0, 0)),
        ]
    args += [wdw_ct, b2.reshape(hidden, 1), wp_t, b3.reshape(oup, 1)]
    in_specs += [
        pl.BlockSpec((hidden, 9), lambda i, r: (0, 0)),
        pl.BlockSpec((hidden, 1), lambda i, r: (0, 0)),
        pl.BlockSpec((oup, hidden), lambda i, r: (0, 0)),
        pl.BlockSpec((oup, 1), lambda i, r: (0, 0)),
    ]
    # TODO(synk): single-buffer the constant operands (pipeline_mode=
    # pl.Buffered(1)) to reclaim double-buffer VMEM on v7x's 64 MiB.

    kernel = functools.partial(
        _inverted_residual_kernel, W=W, TW=TW, halo=halo, hidden_dim=hidden,
        has_expand=has_expand, use_res=use_res)

    out_flat = pl.pallas_call(
        kernel,
        out_shape=jax.ShapeDtypeStruct((n, oup, S), act_dtype),
        grid_spec=pltpu.PrefetchScalarGridSpec(
            num_scalar_prefetch=0,
            grid=(n, R),                           # row-tile axis innermost
            in_specs=in_specs,
            out_specs=pl.BlockSpec((1, oup, TW), lambda i, r: (i, 0, r)),
            scratch_shapes=[pltpu.VMEM((hidden, 2 * halo + TW), jnp.float32)],
        ),
        compiler_params=pltpu.CompilerParams(
            # every (image, row-tile) step is independent -> shard across
            # v7x's two TensorCores
            dimension_semantics=("parallel", "parallel"),
            # v5e's scoped-VMEM default is only 16 MiB; tiles here are sized
            # well under 32 MiB so this is also safe on v6e/v7x (64 MiB phys)
            vmem_limit_bytes=32 * 1024 * 1024,
        ),
    )(*args)

    out = out_flat.reshape(n, oup, H, W)
    if stride == 2:
        # Depthwise + project are pointwise in the output position, so
        # full-resolution compute + decimation is exact.
        # TODO(synk): decimate inside the kernel (store only even rows/cols)
        # to save the 4x extra taps and HBM writes for stride-2 blocks.
        out = out[:, :, ::2, ::2]
    return out


# ----------------------------------------------------------------------------
# Parameters + pure-JAX reference
# ----------------------------------------------------------------------------
def make_inverted_residual_params(key, inp, oup, expand_ratio):
    hidden_dim = int(round(inp * expand_ratio))
    ks = jax.random.split(key, 12)
    p = {}
    if expand_ratio != 1:
        p["w_expand"] = 0.1 * jax.random.normal(ks[0], (inp, hidden_dim),
                                                jnp.float32)
        p["bn1"] = (1.0 + 0.1 * jax.random.normal(ks[1], (hidden_dim,)),
                    0.1 * jax.random.normal(ks[2], (hidden_dim,)),
                    0.1 * jax.random.normal(ks[3], (hidden_dim,)),
                    jnp.abs(1.0 + 0.1 * jax.random.normal(ks[4],
                                                          (hidden_dim,))))
    p["w_dw"] = 0.1 * jax.random.normal(ks[5], (3, 3, hidden_dim), jnp.float32)
    p["bn2"] = (1.0 + 0.1 * jax.random.normal(ks[6], (hidden_dim,)),
                0.1 * jax.random.normal(ks[7], (hidden_dim,)),
                0.1 * jax.random.normal(ks[8], (hidden_dim,)),
                jnp.abs(1.0 + 0.1 * jax.random.normal(ks[9], (hidden_dim,))))
    p["w_proj"] = 0.1 * jax.random.normal(ks[10], (hidden_dim, oup),
                                          jnp.float32)
    p["bn3"] = (jnp.ones((oup,)), jnp.zeros((oup,)),
                0.1 * jax.random.normal(ks[11], (oup,)), jnp.ones((oup,)))
    p["hidden_dim"] = hidden_dim
    return p


def reference_forward(x_nchw, params, inp, oup, stride, expand_ratio):
    use_res_connect = (stride == 1) and (inp == oup)
    hidden_dim = params["hidden_dim"]
    x = jnp.transpose(x_nchw, (0, 2, 3, 1)).astype(jnp.float32)
    dn = ("NHWC", "HWIO", "NHWC")

    y = x
    if expand_ratio != 1:
        s1, b1 = _fold_bn(*params["bn1"])
        y = lax.conv_general_dilated(y, params["w_expand"][None, None],
                                     (1, 1), "VALID", dimension_numbers=dn)
        y = jnp.clip(y * s1 + b1, 0.0, 6.0)

    s2, b2 = _fold_bn(*params["bn2"])
    wdw = params["w_dw"].reshape(3, 3, 1, hidden_dim)
    y = lax.conv_general_dilated(y, wdw, (stride, stride),
                                 [(1, 1), (1, 1)], dimension_numbers=dn,
                                 feature_group_count=hidden_dim)
    y = jnp.clip(y * s2 + b2, 0.0, 6.0)

    s3, b3 = _fold_bn(*params["bn3"])
    y = lax.conv_general_dilated(y, params["w_proj"][None, None],
                                 (1, 1), "VALID", dimension_numbers=dn)
    y = y * s3 + b3
    if use_res_connect:
        y = y + x
    return jnp.transpose(y, (0, 3, 1, 2))


# ----------------------------------------------------------------------------
if __name__ == "__main__":
    # inp == oup and stride == 1 -> residual connection active;
    # expand_ratio=6 -> hidden_dim=24.  H=16, W=16 -> 2 row tiles per image,
    # so the inter-tile halo path is exercised.
    N, INP, OUP, H, W = 2, 4, 4, 16, 16
    STRIDE, EXPAND = 1, 6

    key = jax.random.PRNGKey(0)
    kx, kp = jax.random.split(key)
    x = jax.random.normal(kx, (N, INP, H, W), jnp.float32)
    params = make_inverted_residual_params(kp, INP, OUP, EXPAND)
    ref = reference_forward(x, params, INP, OUP, STRIDE, EXPAND)

    # Default production path: bf16 activations/weights in HBM, f32 accum.
    out_bf16 = inverted_residual_forward(x, params, INP, OUP, STRIDE, EXPAND,
                                         act_dtype=jnp.bfloat16)
    out_bf16 = jax.block_until_ready(out_bf16).astype(jnp.float32)
    assert out_bf16.shape == (N, OUP, H, W), out_bf16.shape
    assert jnp.allclose(out_bf16, ref, atol=3e-2, rtol=3e-2), \
        float(jnp.max(jnp.abs(out_bf16 - ref)))

    # Pure f32 path (tighter structural check: halo rows, masks, residual).
    out_f32 = inverted_residual_forward(x, params, INP, OUP, STRIDE, EXPAND,
                                        act_dtype=jnp.float32)
    out_f32 = jax.block_until_ready(out_f32)
    assert out_f32.shape == (N, OUP, H, W), out_f32.shape
    assert jnp.allclose(out_f32, ref, atol=2e-2, rtol=2e-2), \
        float(jnp.max(jnp.abs(out_f32 - ref)))

    print("KERNEL_OK")
</pallas_src>

<mosaic_0001>
module attributes {stable_mosaic.version = 11 : i64} {
  func.func @_inverted_residual_kernel(%arg0: i32, %arg1: i32, %arg2: memref<1x4x128xbf16, #tpu.memory_space<vmem>>, %arg3: memref<1x1x4x32xbf16, #tpu.memory_space<vmem>>, %arg4: memref<2x128xf32, #tpu.memory_space<vmem>>, %arg5: memref<24x4xbf16, #tpu.memory_space<vmem>>, %arg6: memref<24x1xf32, #tpu.memory_space<vmem>>, %arg7: memref<24x9xf32, #tpu.memory_space<vmem>>, %arg8: memref<24x1xf32, #tpu.memory_space<vmem>>, %arg9: memref<4x24xbf16, #tpu.memory_space<vmem>>, %arg10: memref<4x1xf32, #tpu.memory_space<vmem>>, %arg11: memref<1x4x128xbf16, #tpu.memory_space<vmem>>, %arg12: memref<24x384xf32, #tpu.memory_space<vmem>>) attributes {dimension_semantics = [#tpu.dimension_semantics<parallel>, #tpu.dimension_semantics<parallel>], iteration_bounds = array<i64: 2, 2>, scalar_prefetch = 0 : i64, scratch_operands = 1 : i64, tpu.core_type = #tpu.core_type<tc>, window_params = [{transform_indices = @transform_0, window_bounds = array<i64: 1, 4, 128>}, {transform_indices = @transform_1, window_bounds = array<i64: 1, 1, 4, 32>}, {pipeline_mode = #tpu.pipeline_mode<synchronous>, transform_indices = @transform_2, window_bounds = array<i64: 2, 128>}, {pipeline_mode = #tpu.pipeline_mode<synchronous>, transform_indices = @transform_3, window_bounds = array<i64: 24, 4>}, {pipeline_mode = #tpu.pipeline_mode<synchronous>, transform_indices = @transform_4, window_bounds = array<i64: 24, 1>}, {pipeline_mode = #tpu.pipeline_mode<synchronous>, transform_indices = @transform_5, window_bounds = array<i64: 24, 9>}, {pipeline_mode = #tpu.pipeline_mode<synchronous>, transform_indices = @transform_6, window_bounds = array<i64: 24, 1>}, {pipeline_mode = #tpu.pipeline_mode<synchronous>, transform_indices = @transform_7, window_bounds = array<i64: 4, 24>}, {pipeline_mode = #tpu.pipeline_mode<synchronous>, transform_indices = @transform_8, window_bounds = array<i64: 4, 1>}, {transform_indices = @transform_9, window_bounds = array<i64: 1, 4, 128>}]} {
    %c0 = arith.constant 0 : index
    %c0_0 = arith.constant 0 : index
    %c0_1 = arith.constant 0 : index
    %0 = vector.load %arg2[%c0, %c0_0, %c0_1] : memref<1x4x128xbf16, #tpu.memory_space<vmem>>, vector<1x4x128xbf16>
    %1 = vector.shape_cast %0 : vector<1x4x128xbf16> to vector<4x128xbf16>
    %c0_2 = arith.constant 0 : index
    %c0_3 = arith.constant 0 : index
    %2 = vector.load %arg5[%c0_2, %c0_3] : memref<24x4xbf16, #tpu.memory_space<vmem>>, vector<24x4xbf16>
    %cst = arith.constant dense<0.000000e+00> : vector<24x128xf32>
    %3 = tpu.matmul %2, %1, %cst {dimension_numbers = #tpu.dot_dimension_numbers<[1], [0], [0], [1], [0, 0, 1, 1], [], []>} : vector<24x4xbf16>, vector<4x128xbf16>, vector<24x128xf32> -> vector<24x128xf32>
    %c0_4 = arith.constant 0 : index
    %c0_5 = arith.constant 0 : index
    %4 = vector.load %arg6[%c0_4, %c0_5] : memref<24x1xf32, #tpu.memory_space<vmem>>, vector<24x1xf32>
    %5 = vector.broadcast %4 : vector<24x1xf32> to vector<24x128xf32>
    %6 = arith.addf %3, %5 : vector<24x128xf32>
    %cst_6 = arith.constant 0.000000e+00 : f32
    %cst_7 = arith.constant 6.000000e+00 : f32
    %7 = vector.broadcast %cst_6 : f32 to vector<24x128xf32>
    %8 = arith.maximumf %7, %6 : vector<24x128xf32>
    %9 = vector.broadcast %cst_7 : f32 to vector<24x128xf32>
    %10 = arith.minimumf %9, %8 : vector<24x128xf32>
    %c0_8 = arith.constant 0 : index
    %c128 = arith.constant 128 : index
    %11 = vector.load %arg12[%c0_8, %c128] : memref<24x384xf32, #tpu.memory_space<vmem>>, vector<24x128xf32>
    tpu.vector_store %arg12[%c0_8, %c128], %10 {strides = array<i32>} : memref<24x384xf32, #tpu.memory_space<vmem>>, vector<24x128xf32>,
    %c0_9 = arith.constant 0 : index
    %c0_10 = arith.constant 0 : index
    %c0_11 = arith.constant 0 : index
    %c0_12 = arith.constant 0 : index
    %12 = vector.load %arg3[%c0_9, %c0_10, %c0_11, %c0_12] : memref<1x1x4x32xbf16, #tpu.memory_space<vmem>>, vector<1x1x4x32xbf16>
    %13 = vector.shape_cast %12 : vector<1x1x4x32xbf16> to vector<4x32xbf16>
    %c0_13 = arith.constant 0 : index
    %c0_14 = arith.constant 0 : index
    %14 = vector.load %arg5[%c0_13, %c0_14] : memref<24x4xbf16, #tpu.memory_space<vmem>>, vector<24x4xbf16>
    %cst_15 = arith.constant dense<0.000000e+00> : vector<24x32xf32>
    %15 = tpu.matmul %14, %13, %cst_15 {dimension_numbers = #tpu.dot_dimension_numbers<[1], [0], [0], [1], [0, 0, 1, 1], [], []>} : vector<24x4xbf16>, vector<4x32xbf16>, vector<24x32xf32> -> vector<24x32xf32>
    %c0_16 = arith.constant 0 : index
    %c0_17 = arith.constant 0 : index
    %16 = vector.load %arg6[%c0_16, %c0_17] : memref<24x1xf32, #tpu.memory_space<vmem>>, vector<24x1xf32>
    %17 = vector.broadcast %16 : vector<24x1xf32> to vector<24x32xf32>
    %18 = arith.addf %15, %17 : vector<24x32xf32>
    %cst_18 = arith.constant 0.000000e+00 : f32
    %cst_19 = arith.constant 6.000000e+00 : f32
    %19 = vector.broadcast %cst_18 : f32 to vector<24x32xf32>
    %20 = arith.maximumf %19, %18 : vector<24x32xf32>
    %21 = vector.broadcast %cst_19 : f32 to vector<24x32xf32>
    %22 = arith.minimumf %21, %20 : vector<24x32xf32>
    %c0_i32 = arith.constant 0 : i32
    %23 = arith.cmpi sgt, %arg1, %c0_i32 : i32
    %24 = arith.extui %23 : i1 to i32
    %25 = arith.sitofp %24 : i32 to f32
    %c1_i32 = arith.constant 1 : i32
    %26 = arith.cmpi slt, %arg1, %c1_i32 : i32
    %27 = arith.extui %26 : i1 to i32
    %28 = arith.sitofp %27 : i32 to f32
    %29 = vector.extract_strided_slice %22 {offsets = [0, 0], sizes = [24, 16], strides = [1, 1]} : vector<24x32xf32> to vector<24x16xf32>
    %30 = vector.broadcast %25 : f32 to vector<24x16xf32>
    %31 = arith.mulf %29, %30 : vector<24x16xf32>
    %c0_20 = arith.constant 0 : index
    %c112 = arith.constant 112 : index
    %32 = vector.load %arg12[%c0_20, %c112] : memref<24x384xf32, #tpu.memory_space<vmem>>, vector<24x16xf32>
    tpu.vector_store %arg12[%c0_20, %c112], %31 {strides = array<i32>} : memref<24x384xf32, #tpu.memory_space<vmem>>, vector<24x16xf32>,
    %33 = vector.extract_strided_slice %22 {offsets = [0, 16], sizes = [24, 16], strides = [1, 1]} : vector<24x32xf32> to vector<24x16xf32>
    %34 = vector.broadcast %28 : f32 to vector<24x16xf32>
    %35 = arith.mulf %33, %34 : vector<24x16xf32>
    %c0_21 = arith.constant 0 : index
    %c256 = arith.constant 256 : index
    %36 = vector.load %arg12[%c0_21, %c256] : memref<24x384xf32, #tpu.memory_space<vmem>>, vector<24x16xf32>
    tpu.vector_store %arg12[%c0_21, %c256], %35 {strides = array<i32>} : memref<24x384xf32, #tpu.memory_space<vmem>>, vector<24x16xf32>,
    %cst_22 = arith.constant 0.000000e+00 : f32
    %37 = vector.broadcast %cst_22 : f32 to vector<24x1xf32>
    %c0_23 = arith.constant 0 : index
    %c111 = arith.constant 111 : index
    %38 = vector.load %arg12[%c0_23, %c111] : memref<24x384xf32, #tpu.memory_space<vmem>>, vector<24x1xf32>
    tpu.vector_store %arg12[%c0_23, %c111], %37 {strides = array<i32>} : memref<24x384xf32, #tpu.memory_space<vmem>>, vector<24x1xf32>,
    %c0_24 = arith.constant 0 : index
    %c272 = arith.constant 272 : index
    %39 = vector.load %arg12[%c0_24, %c272] : memref<24x384xf32, #tpu.memory_space<vmem>>, vector<24x1xf32>
    tpu.vector_store %arg12[%c0_24, %c272], %37 {strides = array<i32>} : memref<24x384xf32, #tpu.memory_space<vmem>>, vector<24x1xf32>,
    %c0_25 = arith.constant 0 : index
    %c0_26 = arith.constant 0 : index
    %40 = vector.load %arg4[%c0_25, %c0_26] : memref<2x128xf32, #tpu.memory_space<vmem>>, vector<1x128xf32>
    %c1 = arith.constant 1 : index
    %c0_27 = arith.constant 0 : index
    %41 = vector.load %arg4[%c1, %c0_27] : memref<2x128xf32, #tpu.memory_space<vmem>>, vector<1x128xf32>
    %c0_28 = arith.constant 0 : index
    %c112_29 = arith.constant 112 : index
    %42 = vector.load %arg12[%c0_28, %c112_29] : memref<24x384xf32, #tpu.memory_space<vmem>>, vector<24x128xf32>
    %c0_30 = arith.constant 0 : index
    %c1_31 = arith.constant 1 : index
    %43 = vector.load %arg7[%c0_30, %c1_31] : memref<24x9xf32, #tpu.memory_space<vmem>>, vector<24x1xf32>
    %44 = vector.broadcast %43 : vector<24x1xf32> to vector<24x128xf32>
    %45 = arith.mulf %42, %44 : vector<24x128xf32>
    %c0_32 = arith.constant 0 : index
    %c128_33 = arith.constant 128 : index
    %46 = vector.load %arg12[%c0_32, %c128_33] : memref<24x384xf32, #tpu.memory_space<vmem>>, vector<24x128xf32>
    %c0_34 = arith.constant 0 : index
    %c4 = arith.constant 4 : index
    %47 = vector.load %arg7[%c0_34, %c4] : memref<24x9xf32, #tpu.memory_space<vmem>>, vector<24x1xf32>
    %48 = vector.broadcast %47 : vector<24x1xf32> to vector<24x128xf32>
    %49 = arith.mulf %46, %48 : vector<24x128xf32>
    %50 = arith.addf %45, %49 : vector<24x128xf32>
    %c0_35 = arith.constant 0 : index
    %c144 = arith.constant 144 : index
    %51 = vector.load %arg12[%c0_35, %c144] : memref<24x384xf32, #tpu.memory_space<vmem>>, vector<24x128xf32>
    %c0_36 = arith.constant 0 : index
    %c7 = arith.constant 7 : index
    %52 = vector.load %arg7[%c0_36, %c7] : memref<24x9xf32, #tpu.memory_space<vmem>>, vector<24x1xf32>
    %53 = vector.broadcast %52 : vector<24x1xf32> to vector<24x128xf32>
    %54 = arith.mulf %51, %53 : vector<24x128xf32>
    %55 = arith.addf %50, %54 : vector<24x128xf32>
    %c0_37 = arith.constant 0 : index
    %c111_38 = arith.constant 111 : index
    %56 = vector.load %arg12[%c0_37, %c111_38] : memref<24x384xf32, #tpu.memory_space<vmem>>, vector<24x128xf32>
    %c0_39 = arith.constant 0 : index
    %c0_40 = arith.constant 0 : index
    %57 = vector.load %arg7[%c0_39, %c0_40] : memref<24x9xf32, #tpu.memory_space<vmem>>, vector<24x1xf32>
    %58 = vector.broadcast %57 : vector<24x1xf32> to vector<24x128xf32>
    %59 = arith.mulf %56, %58 : vector<24x128xf32>
    %c0_41 = arith.constant 0 : index
    %c127 = arith.constant 127 : index
    %60 = vector.load %arg12[%c0_41, %c127] : memref<24x384xf32, #tpu.memory_space<vmem>>, vector<24x128xf32>
    %c0_42 = arith.constant 0 : index
    %c3 = arith.constant 3 : index
    %61 = vector.load %arg7[%c0_42, %c3] : memref<24x9xf32, #tpu.memory_space<vmem>>, vector<24x1xf32>
    %62 = vector.broadcast %61 : vector<24x1xf32> to vector<24x128xf32>
    %63 = arith.mulf %60, %62 : vector<24x128xf32>
    %64 = arith.addf %59, %63 : vector<24x128xf32>
    %c0_43 = arith.constant 0 : index
    %c143 = arith.constant 143 : index
    %65 = vector.load %arg12[%c0_43, %c143] : memref<24x384xf32, #tpu.memory_space<vmem>>, vector<24x128xf32>
    %c0_44 = arith.constant 0 : index
    %c6 = arith.constant 6 : index
    %66 = vector.load %arg7[%c0_44, %c6] : memref<24x9xf32, #tpu.memory_space<vmem>>, vector<24x1xf32>
    %67 = vector.broadcast %66 : vector<24x1xf32> to vector<24x128xf32>
    %68 = arith.mulf %65, %67 : vector<24x128xf32>
    %69 = arith.addf %64, %68 : vector<24x128xf32>
    %c0_45 = arith.constant 0 : index
    %c113 = arith.constant 113 : index
    %70 = vector.load %arg12[%c0_45, %c113] : memref<24x384xf32, #tpu.memory_space<vmem>>, vector<24x128xf32>
    %c0_46 = arith.constant 0 : index
    %c2 = arith.constant 2 : index
    %71 = vector.load %arg7[%c0_46, %c2] : memref<24x9xf32, #tpu.memory_space<vmem>>, vector<24x1xf32>
    %72 = vector.broadcast %71 : vector<24x1xf32> to vector<24x128xf32>
    %73 = arith.mulf %70, %72 : vector<24x128xf32>
    %c0_47 = arith.constant 0 : index
    %c129 = arith.constant 129 : index
    %74 = vector.load %arg12[%c0_47, %c129] : memref<24x384xf32, #tpu.memory_space<vmem>>, vector<24x128xf32>
    %c0_48 = arith.constant 0 : index
    %c5 = arith.constant 5 : index
    %75 = vector.load %arg7[%c0_48, %c5] : memref<24x9xf32, #tpu.memory_space<vmem>>, vector<24x1xf32>
    %76 = vector.broadcast %75 : vector<24x1xf32> to vector<24x128xf32>
    %77 = arith.mulf %74, %76 : vector<24x128xf32>
    %78 = arith.addf %73, %77 : vector<24x128xf32>
    %c0_49 = arith.constant 0 : index
    %c145 = arith.constant 145 : index
    %79 = vector.load %arg12[%c0_49, %c145] : memref<24x384xf32, #tpu.memory_space<vmem>>, vector<24x128xf32>
    %c0_50 = arith.constant 0 : index
    %c8 = arith.constant 8 : index
    %80 = vector.load %arg7[%c0_50, %c8] : memref<24x9xf32, #tpu.memory_space<vmem>>, vector<24x1xf32>
    %81 = vector.broadcast %80 : vector<24x1xf32> to vector<24x128xf32>
    %82 = arith.mulf %79, %81 : vector<24x128xf32>
    %83 = arith.addf %78, %82 : vector<24x128xf32>
    %84 = vector.broadcast %40 : vector<1x128xf32> to vector<24x128xf32>
    %85 = arith.mulf %69, %84 : vector<24x128xf32>
    %86 = arith.addf %55, %85 : vector<24x128xf32>
    %87 = vector.broadcast %41 : vector<1x128xf32> to vector<24x128xf32>
    %88 = arith.mulf %83, %87 : vector<24x128xf32>
    %89 = arith.addf %86, %88 : vector<24x128xf32>
    %c0_51 = arith.constant 0 : index
    %c0_52 = arith.constant 0 : index
    %90 = vector.load %arg8[%c0_51, %c0_52] : memref<24x1xf32, #tpu.memory_space<vmem>>, vector<24x1xf32>
    %91 = vector.broadcast %90 : vector<24x1xf32> to vector<24x128xf32>
    %92 = arith.addf %89, %91 : vector<24x128xf32>
    %cst_53 = arith.constant 0.000000e+00 : f32
    %cst_54 = arith.constant 6.000000e+00 : f32
    %93 = vector.broadcast %cst_53 : f32 to vector<24x128xf32>
    %94 = arith.maximumf %93, %92 : vector<24x128xf32>
    %95 = vector.broadcast %cst_54 : f32 to vector<24x128xf32>
    %96 = arith.minimumf %95, %94 : vector<24x128xf32>
    %c0_55 = arith.constant 0 : index
    %c0_56 = arith.constant 0 : index
    %97 = vector.load %arg9[%c0_55, %c0_56] : memref<4x24xbf16, #tpu.memory_space<vmem>>, vector<4x24xbf16>
    %98 = arith.truncf %96 : vector<24x128xf32> to vector<24x128xbf16>
    %cst_57 = arith.constant dense<0.000000e+00> : vector<4x128xf32>
    %99 = tpu.matmul %97, %98, %cst_57 {dimension_numbers = #tpu.dot_dimension_numbers<[1], [0], [0], [1], [0, 0, 1, 1], [], []>} : vector<4x24xbf16>, vector<24x128xbf16>, vector<4x128xf32> -> vector<4x128xf32>
    %c0_58 = arith.constant 0 : index
    %c0_59 = arith.constant 0 : index
    %100 = vector.load %arg10[%c0_58, %c0_59] : memref<4x1xf32, #tpu.memory_space<vmem>>, vector<4x1xf32>
    %101 = vector.broadcast %100 : vector<4x1xf32> to vector<4x128xf32>
    %102 = arith.addf %99, %101 : vector<4x128xf32>
    %103 = arith.extf %1 : vector<4x128xbf16> to vector<4x128xf32>
    %104 = arith.addf %102, %103 : vector<4x128xf32>
    %105 = arith.truncf %104 : vector<4x128xf32> to vector<4x128xbf16>
    %c0_60 = arith.constant 0 : index
    %c0_61 = arith.constant 0 : index
    %c0_62 = arith.constant 0 : index
    %106 = vector.load %arg11[%c0_60, %c0_61, %c0_62] : memref<1x4x128xbf16, #tpu.memory_space<vmem>>, vector<1x4x128xbf16>
    %107 = vector.shape_cast %106 : vector<1x4x128xbf16> to vector<4x128xbf16>
    %108 = vector.shape_cast %105 : vector<4x128xbf16> to vector<1x4x128xbf16>
    tpu.vector_store %arg11[%c0_60, %c0_61, %c0_62], %108 {strides = array<i32>} : memref<1x4x128xbf16, #tpu.memory_space<vmem>>, vector<1x4x128xbf16>,
    return
  }
  func.func @transform_0(%arg0: i32, %arg1: i32) -> (i32, i32, i32) {
    %c0_i32 = arith.constant 0 : i32
    %c0_i32_0 = arith.constant 0 : i32
    return %arg0, %c0_i32, %arg1 : i32, i32, i32
  }
  func.func @transform_1(%arg0: i32, %arg1: i32) -> (i32, i32, i32, i32) {
    %c0_i32 = arith.constant 0 : i32
    %c0_i32_0 = arith.constant 0 : i32
    %c0_i32_1 = arith.constant 0 : i32
    return %arg0, %arg1, %c0_i32, %c0_i32_0 : i32, i32, i32, i32
  }
  func.func @transform_2(%arg0: i32, %arg1: i32) -> (i32, i32) {
    %c0_i32 = arith.constant 0 : i32
    %c0_i32_0 = arith.constant 0 : i32
    %c0_i32_1 = arith.constant 0 : i32
    return %c0_i32, %c0_i32_0 : i32, i32
  }
  func.func @transform_3(%arg0: i32, %arg1: i32) -> (i32, i32) {
    %c0_i32 = arith.constant 0 : i32
    %c0_i32_0 = arith.constant 0 : i32
    %c0_i32_1 = arith.constant 0 : i32
    return %c0_i32, %c0_i32_0 : i32, i32
  }
  func.func @transform_4(%arg0: i32, %arg1: i32) -> (i32, i32) {
    %c0_i32 = arith.constant 0 : i32
    %c0_i32_0 = arith.constant 0 : i32
    %c0_i32_1 = arith.constant 0 : i32
    return %c0_i32, %c0_i32_0 : i32, i32
  }
  func.func @transform_5(%arg0: i32, %arg1: i32) -> (i32, i32) {
    %c0_i32 = arith.constant 0 : i32
    %c0_i32_0 = arith.constant 0 : i32
    %c0_i32_1 = arith.constant 0 : i32
    return %c0_i32, %c0_i32_0 : i32, i32
  }
  func.func @transform_6(%arg0: i32, %arg1: i32) -> (i32, i32) {
    %c0_i32 = arith.constant 0 : i32
    %c0_i32_0 = arith.constant 0 : i32
    %c0_i32_1 = arith.constant 0 : i32
    return %c0_i32, %c0_i32_0 : i32, i32
  }
  func.func @transform_7(%arg0: i32, %arg1: i32) -> (i32, i32) {
    %c0_i32 = arith.constant 0 : i32
    %c0_i32_0 = arith.constant 0 : i32
    %c0_i32_1 = arith.constant 0 : i32
    return %c0_i32, %c0_i32_0 : i32, i32
  }
  func.func @transform_8(%arg0: i32, %arg1: i32) -> (i32, i32) {
    %c0_i32 = arith.constant 0 : i32
    %c0_i32_0 = arith.constant 0 : i32
    %c0_i32_1 = arith.constant 0 : i32
    return %c0_i32, %c0_i32_0 : i32, i32
  }
  func.func @transform_9(%arg0: i32, %arg1: i32) -> (i32, i32, i32) {
    %c0_i32 = arith.constant 0 : i32
    %c0_i32_0 = arith.constant 0 : i32
    return %arg0, %c0_i32, %arg1 : i32, i32, i32
  }
}

</mosaic_0001>

<llo_original>
// kernel: tpu_custom_call.1
$region0: #{tpu_custom_call.1}
  #allocation0 [shape = 'u32[]', space=smem, size = 0x4, offset = 0x4, fixed_abs, tag = 'smem constant byte address 0x4 - core index']
  #allocation1 [shape = 'u32[144,128]{1,0:T(1,128)}', space=vmem, size = 0x12000, scoped, tag = 'internal scratch']
  #allocation2 [shape = 'f32[24,384]{1,0:T(8,128)}', space=vmem, size = 0x9000, scoped, tag = 'scratch operand']
  %s0 = inlined_call_operand.vmem [shape: bf16[2,4,256], index: 0, kind: input, shape index: {}]
  %s1 = inlined_call_operand.vmem [shape: bf16[2,2,4,32], index: 1, kind: input, shape index: {}]
  %s2 = inlined_call_operand.vmem [shape: f32[2,128], index: 2, kind: input, shape index: {}]
  %s3 = inlined_call_operand.vmem [shape: bf16[24,4], index: 3, kind: input, shape index: {}]
  %s4 = inlined_call_operand.vmem [shape: f32[24,1], index: 4, kind: input, shape index: {}]
  %s5 = inlined_call_operand.vmem [shape: f32[24,9], index: 5, kind: input, shape index: {}]
  %s6 = inlined_call_operand.vmem [shape: f32[24,1], index: 6, kind: input, shape index: {}]
  %s7 = inlined_call_operand.vmem [shape: bf16[4,24], index: 7, kind: input, shape index: {}]
  %s8 = inlined_call_operand.vmem [shape: f32[4,1], index: 8, kind: input, shape index: {}]
  %s9 = inlined_call_operand.hbm [shape: bf16[2,4,256], index: 9, kind: output, shape index: {}]
  %s10 = sld [smem:[#allocation0]]
  $region69: #{tpu_custom_call.1} parent=0
    _
  %s12 = ssub.s32 1, %s10
  %s13 = scalar_select 0, %s12, %s10
  $region1: #{tpu_custom_call.1} parent=0
    #allocation3 [shape = 'u8[2048]{0}', space=vmem, size = 0x800, scoped, tag = 'output window, operand 0']
    #allocation4 [shape = 's32[2]{0}', space=sflag, size = 0x8, scoped, tag = 'scoped memory for tpu_custom_call.1']
    %14 = vsyncpa [#allocation4], 0
    %s15 = scalar_lea.sflag [#allocation4], 1
    %16 = vsyncpa %s15, 0
    loop: start=0, step=1, limit=6
    $region2: #{tpu_custom_call.1} parent=1 // loop_pre_header
      _
    $region3: #{tpu_custom_call.1} parent=1 // loop_header
      %s18 = sphi 0, %s22
      %p19 = scmp.ge.s32.totalorder %s18, 6
      %s25 = sphi 0, %s37
      %s26 = sphi 0, %s33
      %s27 = sphi 0, %s25
      %s28 = sphi 0, %s26
      %s29 = sphi 0, %s27
      %s30 = sphi 0, %s28
      %s42 = sphi 0, %s44
      %s45 = sphi 0, %s42
      %s46 = sphi 0, %s45
      %s62 = sphi 0, %s46
      %s70 = sphi 0, %s72
      %s73 = sphi 0, %s70
      %s74 = sphi 0, %s73
      %s90 = sphi 0, %s74
      %s94 = sphi 0, %s94
      %s96 = sphi 0, %s94
      %s97 = sphi 0, %s96
      %s111 = sphi 0, %s97
      %s115 = sphi 0, %s115
      %s117 = sphi 0, %s115
      %s118 = sphi 0, %s117
      %s132 = sphi 0, %s118
      %s136 = sphi 0, %s136
      %s138 = sphi 0, %s136
      %s139 = sphi 0, %s138
      %s153 = sphi 0, %s139
      %s157 = sphi 0, %s157
      %s159 = sphi 0, %s157
      %s160 = sphi 0, %s159
      %s174 = sphi 0, %s160
      %s178 = sphi 0, %s178
      %s180 = sphi 0, %s178
      %s181 = sphi 0, %s180
      %s195 = sphi 0, %s181
      %s199 = sphi 0, %s199
      %s201 = sphi 0, %s199
      %s202 = sphi 0, %s201
      %s216 = sphi 0, %s202
      %s220 = sphi 0, %s220
      %s222 = sphi 0, %s220
      %s223 = sphi 0, %s222
      %s237 = sphi 0, %s223
      %s245 = sphi 0, %s247
      %s248 = sphi 0, %s245
      %s249 = sphi 0, %s248
      %s265 = sphi 0, %s249
    $region4: #{tpu_custom_call.1} parent=1 // loop_header_branch
      %21 = sbr.rel (%p19) target = $region8
    $region5: #{tpu_custom_call.1} parent=1 // loop_body
      %s23 = ssub.s32 %s18, 1
      %s24 = ssub.s32 %s18, 2
      %s31 = sadd.s32 1, %s26
      %p32 = scmp.ge.s32.totalorder %s31, 2
      %s33 = scalar_select %p32, 0, %s31
      %s34 = sadd.s32 1, %s25
      %s35 = scalar_select %p32, %s34, %s25
      %p36 = scmp.ge.s32.totalorder %s35, 2
      %s37 = scalar_select %p36, 0, %s35
      %s38 = ssub.s32 %s25, %s37
      %s39 = ssub.s32 %s26, %s33
      %s40 = sor.u32 %s38, %s39
      %p41 = scmp.eq.s32.totalorder %s40, 0
      %s43 = sadd.s32 %s42, 1
      %s44 = scalar_select %p41, %s42, %s43
      %p47 = pneg %p41
      %p48 = scmp.eq.s32.totalorder %s18, 3
      %p49 = por %p47, %p48
      %p50 = scmp.ne.s32.totalorder %s42, %s45
      %p51 = scmp.eq.s32.totalorder %s18, 0
      %p52 = por %p50, %p51
      %p53 = scmp.ne.s32.totalorder %s42, %s45
      %p54 = scmp.eq.s32.totalorder %s23, 3
      %p55 = por %p53, %p54
      %p56 = scmp.ne.s32.totalorder %s45, %s46
      %p57 = scmp.eq.s32.totalorder %s23, 0
      %p58 = por %p56, %p57
      %p59 = scmp.ne.s32.totalorder %s45, %s46
      %p60 = scmp.eq.s32.totalorder %s24, 3
      %p61 = por %p59, %p60
      %p63 = scmp.ne.s32.totalorder %s46, %s62
      %p64 = scmp.eq.s32.totalorder %s24, 0
      %p65 = por %p63, %p64
      %s66 = ssub.s32 %s25, %s37
      %s67 = ssub.s32 %s26, %s33
      %s68 = sor.u32 %s66, %s67
      %p69 = scmp.eq.s32.totalorder %s68, 0
      %s71 = sadd.s32 %s70, 1
      %s72 = scalar_select %p69, %s70, %s71
      %p75 = pneg %p69
      %p76 = scmp.eq.s32.totalorder %s18, 3
      %p77 = por %p75, %p76
      %p78 = scmp.ne.s32.totalorder %s70, %s73
      %p79 = scmp.eq.s32.totalorder %s18, 0
      %p80 = por %p78, %p79
      %p81 = scmp.ne.s32.totalorder %s70, %s73
      %p82 = scmp.eq.s32.totalorder %s23, 3
      %p83 = por %p81, %p82
      %p84 = scmp.ne.s32.totalorder %s73, %s74
      %p85 = scmp.eq.s32.totalorder %s23, 0
      %p86 = por %p84, %p85
      %p87 = scmp.ne.s32.totalorder %s73, %s74
      %p88 = scmp.eq.s32.totalorder %s24, 3
      %p89 = por %p87, %p88
      %p91 = scmp.ne.s32.totalorder %s74, %s90
      %p92 = scmp.eq.s32.totalorder %s24, 0
      %p93 = por %p91, %p92
      %s95 = sadd.s32 %s94, 1
      %p98 = scmp.eq.s32.totalorder %s18, 3
      %p99 = scmp.ne.s32.totalorder %s94, %s96
      %p100 = scmp.eq.s32.totalorder %s18, 0
      %p101 = por %p99, %p100
      %p102 = scmp.ne.s32.totalorder %s94, %s96
      %p103 = scmp.eq.s32.totalorder %s23, 3
      %p104 = por %p102, %p103
      %p105 = scmp.ne.s32.totalorder %s96, %s97
      %p106 = scmp.eq.s32.totalorder %s23, 0
      %p107 = por %p105, %p106
      %p108 = scmp.ne.s32.totalorder %s96, %s97
      %p109 = scmp.eq.s32.totalorder %s24, 3
      %p110 = por %p108, %p109
      %p112 = scmp.ne.s32.totalorder %s97, %s111
      %p113 = scmp.eq.s32.totalorder %s24, 0
      %p114 = por %p112, %p113
      %s116 = sadd.s32 %s115, 1
      %p119 = scmp.eq.s32.totalorder %s18, 3
      %p120 = scmp.ne.s32.totalorder %s115, %s117
      %p121 = scmp.eq.s32.totalorder %s18, 0
      %p122 = por %p120, %p121
      %p123 = scmp.ne.s32.totalorder %s115, %s117
      %p124 = scmp.eq.s32.totalorder %s23, 3
      %p125 = por %p123, %p124
      %p126 = scmp.ne.s32.totalorder %s117, %s118
      %p127 = scmp.eq.s32.totalorder %s23, 0
      %p128 = por %p126, %p127
      %p129 = scmp.ne.s32.totalorder %s117, %s118
      %p130 = scmp.eq.s32.totalorder %s24, 3
      %p131 = por %p129, %p130
      %p133 = scmp.ne.s32.totalorder %s118, %s132
      %p134 = scmp.eq.s32.totalorder %s24, 0
      %p135 = por %p133, %p134
      %s137 = sadd.s32 %s136, 1
      %p140 = scmp.eq.s32.totalorder %s18, 3
      %p141 = scmp.ne.s32.totalorder %s136, %s138
      %p142 = scmp.eq.s32.totalorder %s18, 0
      %p143 = por %p141, %p142
      %p144 = scmp.ne.s32.totalorder %s136, %s138
      %p145 = scmp.eq.s32.totalorder %s23, 3
      %p146 = por %p144, %p145
      %p147 = scmp.ne.s32.totalorder %s138, %s139
      %p148 = scmp.eq.s32.totalorder %s23, 0
      %p149 = por %p147, %p148
      %p150 = scmp.ne.s32.totalorder %s138, %s139
      %p151 = scmp.eq.s32.totalorder %s24, 3
      %p152 = por %p150, %p151
      %p154 = scmp.ne.s32.totalorder %s139, %s153
      %p155 = scmp.eq.s32.totalorder %s24, 0
      %p156 = por %p154, %p155
      %s158 = sadd.s32 %s157, 1
      %p161 = scmp.eq.s32.totalorder %s18, 3
      %p162 = scmp.ne.s32.totalorder %s157, %s159
      %p163 = scmp.eq.s32.totalorder %s18, 0
      %p164 = por %p162, %p163
      %p165 = scmp.ne.s32.totalorder %s157, %s159
      %p166 = scmp.eq.s32.totalorder %s23, 3
      %p167 = por %p165, %p166
      %p168 = scmp.ne.s32.totalorder %s159, %s160
      %p169 = scmp.eq.s32.totalorder %s23, 0
      %p170 = por %p168, %p169
      %p171 = scmp.ne.s32.totalorder %s159, %s160
      %p172 = scmp.eq.s32.totalorder %s24, 3
      %p173 = por %p171, %p172
      %p175 = scmp.ne.s32.totalorder %s160, %s174
      %p176 = scmp.eq.s32.totalorder %s24, 0
      %p177 = por %p175, %p176
      %s179 = sadd.s32 %s178, 1
      %p182 = scmp.eq.s32.totalorder %s18, 3
      %p183 = scmp.ne.s32.totalorder %s178, %s180
      %p184 = scmp.eq.s32.totalorder %s18, 0
      %p185 = por %p183, %p184
      %p186 = scmp.ne.s32.totalorder %s178, %s180
      %p187 = scmp.eq.s32.totalorder %s23, 3
      %p188 = por %p186, %p187
      %p189 = scmp.ne.s32.totalorder %s180, %s181
      %p190 = scmp.eq.s32.totalorder %s23, 0
      %p191 = por %p189, %p190
      %p192 = scmp.ne.s32.totalorder %s180, %s181
      %p193 = scmp.eq.s32.totalorder %s24, 3
      %p194 = por %p192, %p193
      %p196 = scmp.ne.s32.totalorder %s181, %s195
      %p197 = scmp.eq.s32.totalorder %s24, 0
      %p198 = por %p196, %p197
      %s200 = sadd.s32 %s199, 1
      %p203 = scmp.eq.s32.totalorder %s18, 3
      %p204 = scmp.ne.s32.totalorder %s199, %s201
      %p205 = scmp.eq.s32.totalorder %s18, 0
      %p206 = por %p204, %p205
      %p207 = scmp.ne.s32.totalorder %s199, %s201
      %p208 = scmp.eq.s32.totalorder %s23, 3
      %p209 = por %p207, %p208
      %p210 = scmp.ne.s32.totalorder %s201, %s202
      %p211 = scmp.eq.s32.totalorder %s23, 0
      %p212 = por %p210, %p211
      %p213 = scmp.ne.s32.totalorder %s201, %s202
      %p214 = scmp.eq.s32.totalorder %s24, 3
      %p215 = por %p213, %p214
      %p217 = scmp.ne.s32.totalorder %s202, %s216
      %p218 = scmp.eq.s32.totalorder %s24, 0
      %p219 = por %p217, %p218
      %s221 = sadd.s32 %s220, 1
      %p224 = scmp.eq.s32.totalorder %s18, 3
      %p225 = scmp.ne.s32.totalorder %s220, %s222
      %p226 = scmp.eq.s32.totalorder %s18, 0
      %p227 = por %p225, %p226
      %p228 = scmp.ne.s32.totalorder %s220, %s222
      %p229 = scmp.eq.s32.totalorder %s23, 3
      %p230 = por %p228, %p229
      %p231 = scmp.ne.s32.totalorder %s222, %s223
      %p232 = scmp.eq.s32.totalorder %s23, 0
      %p233 = por %p231, %p232
      %p234 = scmp.ne.s32.totalorder %s222, %s223
      %p235 = scmp.eq.s32.totalorder %s24, 3
      %p236 = por %p234, %p235
      %p238 = scmp.ne.s32.totalorder %s223, %s237
      %p239 = scmp.eq.s32.totalorder %s24, 0
      %p240 = por %p238, %p239
      %s241 = ssub.s32 %s25, %s37
      %s242 = ssub.s32 %s26, %s33
      %s243 = sor.u32 %s241, %s242
      %p244 = scmp.eq.s32.totalorder %s243, 0
      %s246 = sadd.s32 %s245, 1
      %s247 = scalar_select %p244, %s245, %s246
      %p250 = pneg %p244
      %p251 = scmp.eq.s32.totalorder %s18, 3
      %p252 = por %p250, %p251
      %p253 = scmp.ne.s32.totalorder %s245, %s248
      %p254 = scmp.eq.s32.totalorder %s18, 0
      %p255 = por %p253, %p254
      %p256 = scmp.ne.s32.totalorder %s245, %s248
      %p257 = scmp.eq.s32.totalorder %s23, 3
      %p258 = por %p256, %p257
      %p259 = scmp.ne.s32.totalorder %s248, %s249
      %p260 = scmp.eq.s32.totalorder %s23, 0
      %p261 = por %p259, %p260
      %p262 = scmp.ne.s32.totalorder %s248, %s249
      %p263 = scmp.eq.s32.totalorder %s24, 3
      %p264 = por %p262, %p263
      %p266 = scmp.ne.s32.totalorder %s249, %s265
      %p267 = scmp.eq.s32.totalorder %s24, 0
      %p268 = por %p266, %p267
      %p269 = scmp.le.s32.totalorder 1, %s18
      %p270 = scmp.lt.s32.totalorder %s18, 5
      %p271 = pnand %p269, %p270
      %p272 = pneg %p271
      // Predicated region
      $region9: #{tpu_custom_call.1} parent=5 // pred_check
        _
      $region10: #{tpu_custom_call.1} parent=5 // pred_check_branch
        %274 = sbr.rel (%p271) target = $region12
      $region11: #{tpu_custom_call.1} parent=5 // pred_region
        %s275 = ssub.s32 %s18, 1
        // Predicated region
        $region13: #{tpu_custom_call.1} parent=11 // pred_check
          %p276 = pneg %p107
        $region14: #{tpu_custom_call.1} parent=11 // pred_check_branch
          %278 = sbr.rel (%p276) target = $region16
        $region15: #{tpu_custom_call.1} parent=11 // pred_region
          _
        $region16: #{tpu_custom_call.1} parent=11 // pred_fallthru
          _
        // Predicated region
        $region17: #{tpu_custom_call.1} parent=11 // pred_check
          %p279 = pneg %p128
        $region18: #{tpu_custom_call.1} parent=11 // pred_check_branch
          %281 = sbr.rel (%p279) target = $region20
        $region19: #{tpu_custom_call.1} parent=11 // pred_region
          _
        $region20: #{tpu_custom_call.1} parent=11 // pred_fallthru
          _
        // Predicated region
        $region21: #{tpu_custom_call.1} parent=11 // pred_check
          %p282 = pneg %p149
        $region22: #{tpu_custom_call.1} parent=11 // pred_check_branch
          %284 = sbr.rel (%p282) target = $region24
        $region23: #{tpu_custom_call.1} parent=11 // pred_region
          _
        $region24: #{tpu_custom_call.1} parent=11 // pred_fallthru
          _
        // Predicated region
        $region25: #{tpu_custom_call.1} parent=11 // pred_check
          %p285 = pneg %p170
        $region26: #{tpu_custom_call.1} parent=11 // pred_check_branch
          %287 = sbr.rel (%p285) target = $region28
        $region27: #{tpu_custom_call.1} parent=11 // pred_region
          _
        $region28: #{tpu_custom_call.1} parent=11 // pred_fallthru
          _
        // Predicated region
        $region29: #{tpu_custom_call.1} parent=11 // pred_check
          %p288 = pneg %p191
        $region30: #{tpu_custom_call.1} parent=11 // pred_check_branch
          %290 = sbr.rel (%p288) target = $region32
        $region31: #{tpu_custom_call.1} parent=11 // pred_region
          _
        $region32: #{tpu_custom_call.1} parent=11 // pred_fallthru
          _
        // Predicated region
        $region33: #{tpu_custom_call.1} parent=11 // pred_check
          %p291 = pneg %p212
        $region34: #{tpu_custom_call.1} parent=11 // pred_check_branch
          %293 = sbr.rel (%p291) target = $region36
        $region35: #{tpu_custom_call.1} parent=11 // pred_region
          _
        $region36: #{tpu_custom_call.1} parent=11 // pred_fallthru
          _
        // Predicated region
        $region37: #{tpu_custom_call.1} parent=11 // pred_check
          %p294 = pneg %p233
        $region38: #{tpu_custom_call.1} parent=11 // pred_check_branch
          %296 = sbr.rel (%p294) target = $region40
        $region39: #{tpu_custom_call.1} parent=11 // pred_region
          _
        $region40: #{tpu_custom_call.1} parent=11 // pred_fallthru
          _
      $region12: #{tpu_custom_call.1} parent=5 // pred_fallthru
        _
      %p297 = scmp.lt.s32.totalorder %s18, 4
      // Predicated region
      $region41: #{tpu_custom_call.1} parent=5 // pred_check
        %p298 = pneg %p297
      $region42: #{tpu_custom_call.1} parent=5 // pred_check_branch
        %300 = sbr.rel (%p298) target = $region44
      $region43: #{tpu_custom_call.1} parent=5 // pred_region
        // Predicated region
        $region45: #{tpu_custom_call.1} parent=43 // pred_check
          %p301 = pneg %p52
        $region46: #{tpu_custom_call.1} parent=43 // pred_check_branch
          %303 = sbr.rel (%p301) target = $region48
        $region47: #{tpu_custom_call.1} parent=43 // pred_region
          %p304 = scmp.lt.s32.totalorder %s25, 1
          %s305 = scalar_select %p304, %s25, 1
          %p306 = scmp.lt.s32.totalorder %s26, 1
          %s307 = scalar_select %p306, %s26, 1
          %s308 = smul.addr %s305, 2
          %s309 = sadd.s32 %s307, %s308
          %s310 = smul.addr %s309, 2
          %s311 = scalar_lea.vmem %s0, %s310
        $region48: #{tpu_custom_call.1} parent=43 // pred_fallthru
          _
        // Predicated region
        $region49: #{tpu_custom_call.1} parent=43 // pred_check
          %p312 = pneg %p80
        $region50: #{tpu_custom_call.1} parent=43 // pred_check_branch
          %314 = sbr.rel (%p312) target = $region52
        $region51: #{tpu_custom_call.1} parent=43 // pred_region
          %p315 = scmp.lt.s32.totalorder %s25, 1
          %s316 = scalar_select %p315, %s25, 1
          %p317 = scmp.lt.s32.totalorder %s26, 1
          %s318 = scalar_select %p317, %s26, 1
          %s319 = smul.addr %s316, 2
          %s320 = sadd.s32 %s318, %s319
          %s321 = smul.addr %s320, 2
          %s322 = scalar_lea.vmem %s1, %s321
        $region52: #{tpu_custom_call.1} parent=43 // pred_fallthru
          _
      $region44: #{tpu_custom_call.1} parent=5 // pred_fallthru
        _
      %p323 = scmp.le.s32.totalorder 1, %s18
      %p324 = scmp.lt.s32.totalorder %s18, 5
      %p325 = pnand %p323, %p324
      %p326 = pneg %p325
      // Predicated region
      $region53: #{tpu_custom_call.1} parent=5 // pred_check
        _
      $region54: #{tpu_custom_call.1} parent=5 // pred_check_branch
        %328 = sbr.rel (%p325) target = $region56
      $region55: #{tpu_custom_call.1} parent=5 // pred_region
        %s329 = ssub.s32 %s18, 1
        %p330 = scmp.lt.s32.totalorder %s27, 1
        %s331 = scalar_select %p330, %s27, 1
        %p332 = scmp.lt.s32.totalorder %s28, 1
        %s333 = scalar_select %p332, %s28, 1
        %s334 = smul.addr %s331, 2
        %s335 = sadd.s32 %s333, %s334
        %s336 = smul.addr %s335, 2
        %s337 = scalar_lea.vmem %s0, %s336
        %p338 = pneg %p58
        %p339 = pneg %p55
        %p340 = scmp.lt.s32.totalorder %s27, 1
        %s341 = scalar_select %p340, %s27, 1
        %p342 = scmp.lt.s32.totalorder %s28, 1
        %s343 = scalar_select %p342, %s28, 1
        %s344 = smul.addr %s341, 2
        %s345 = sadd.s32 %s343, %s344
        %s346 = smul.addr %s345, 2
        %s347 = scalar_lea.vmem %s1, %s346
        %p348 = pneg %p86
        %p349 = pneg %p83
        %p350 = pneg %p107
        %p351 = pneg %p104
        %p352 = pneg %p128
        %p353 = pneg %p125
        %p354 = pneg %p149
        %p355 = pneg %p146
        %p356 = pneg %p170
        %p357 = pneg %p167
        %p358 = pneg %p191
        %p359 = pneg %p188
        %p360 = pneg %p212
        %p361 = pneg %p209
        %p362 = pneg %p233
        %p363 = pneg %p230
        %p364 = pneg %p261
        %p365 = pneg %p258
        %s366 = sand.u32 %s248, 1
        %s367 = scalar_lea.sflag [#allocation4], %s366
        %s368 = sand.u32 %s248, 1
        %s369 = smul.addr %s368, 2
        %s370 = scalar_lea.vmem [#allocation3], %s369
        %p371 = scmp.lt.s32.totalorder %s27, 1
        %s372 = scalar_select %p371, %s27, 1
        %p373 = scmp.lt.s32.totalorder %s28, 1
        %s374 = scalar_select %p373, %s28, 1
        %s375 = smul.addr %s372, 2
        %s376 = sadd.s32 %s374, %s375
        %s377 = smul.addr %s376, 2
        %s378 = scalar_lea.vmem %s0, %s377
        %p379 = scmp.lt.s32.totalorder %s27, 1
        %s380 = scalar_select %p379, %s27, 1
        %p381 = scmp.lt.s32.totalorder %s28, 1
        %s382 = scalar_select %p381, %s28, 1
        %s383 = smul.addr %s380, 2
        %s384 = sadd.s32 %s382, %s383
        %s385 = smul.addr %s384, 2
        %s386 = scalar_lea.vmem %s1, %s385
        %v388 = vld [vmem:[%s378] sm:$0x3]
        %v389 = vld [vmem:[%s3] sm:$0xf]
        %v390 = vld [vmem:[%s3 + $0x4] sm:$0xf]
        %v391 = vld [vmem:[%s3 + $0x8] sm:$0xf]
        %v392 = vld [vmem:[%s4] sm:$0xff]
        %v393 = vld [vmem:[%s4 + $0x8] sm:$0xff]
        %v394 = vld [vmem:[%s4 + $0x10] sm:$0xff]
        %396 = vset.pattern.permute.xlu0 0
        %397 = vperm.xlu0 %396, %v392
        %v398 = vpop.permute.xlu0 %397
        %401 = vset.pattern.permute.xlu0 0
        %402 = vperm.xlu0 %401, %v393
        %v403 = vpop.permute.xlu0 %402
        %406 = vset.pattern.permute.xlu0 0
        %407 = vperm.xlu0 %406, %v394
        %v408 = vpop.permute.xlu0 %407
        %v413 = vunpack.c.l.b16 %v389
        %v414 = vunpack.c.l.b16 %v390
        %v415 = vunpack.c.l.b16 %v391
        %v416 = vpack.c.b16 %v414, %v413
        %v417 = vpack.c.b16 %v415, %v415
        %vm418 = vcmask 31744
        %v420 = vsel %vm418, %v416, 0
        %v423 = vsel %vm418, %v417, 0
        %vm425 = vcmask 1041408
        %v427 = vsel %vm425, %v388, 0
        %429 = vmatprep.subr.bf16.mxu0 0
        %430 = vmatpush1.bf16.msra.mxu0 %v427
        %431 = vmatprep.subr.bf16.mxu0 0
        %432 = vmatpush1.bf16.msra.mxu0 0
        %433 = vmatprep.subr.bf16.mxu0 0
        %434 = vmatpush1.bf16.msra.mxu0 0
        %435 = vmatprep.subr.bf16.mxu0 0
        %436 = vmatpush1.bf16.msra.mxu0 0
        %437 = vmatprep.subr.bf16.mxu0 0
        %438 = vmatpush1.bf16.msra.mxu0 0
        %439 = vmatprep.subr.bf16.mxu0 0
        %440 = vmatpush1.bf16.msra.mxu0 0
        %441 = vmatprep.subr.bf16.mxu0 0
        %442 = vmatpush1.bf16.msra.mxu0 0
        %443 = vmatprep.subr.bf16.mxu0 0
        %444 = vmatpush1.bf16.msra.mxu0 0
        %445 = vmatprep.subr.bf16.mxu0 0
        %446 = vmatpush1.bf16.msra.mxu0 0
        %447 = vmatprep.subr.bf16.mxu0 0
        %448 = vmatpush1.bf16.msra.mxu0 0
        %449 = vmatprep.subr.bf16.mxu0 0
        %450 = vmatpush1.bf16.msra.mxu0 0
        %451 = vmatprep.subr.bf16.mxu0 0
        %452 = vmatpush1.bf16.msra.mxu0 0
        %453 = vmatprep.subr.bf16.mxu0 0
        %454 = vmatpush1.bf16.msra.mxu0 0
        %455 = vmatprep.subr.bf16.mxu0 0
        %456 = vmatpush1.bf16.msra.mxu0 0
        %457 = vmatprep.subr.bf16.mxu0 0
        %458 = vmatpush1.bf16.msra.mxu0 0
        %459 = vmatprep.subr.bf16.mxu0 0
        %460 = vmatpush1.bf16.msra.mxu0 0
        %461 = vmatprep.mubr.bf16.mxu0 0
        %462 = vmatmul.mubr.bf16.gmra.mrb[0].mxu0 %v420
        %v463 = vpop.f32.mrb[0].mxu0
        %v464 = vadd.f32 %v398, %v463
        %v465 = vpop.f32.mrb[0].mxu0
        %v466 = vpop.f32.mrb[0].mxu0
        %v467 = vadd.f32 %v403, %v466
        %v468 = vpop.f32.mrb[0].mxu0
        %469 = vmatprep.mubr.bf16.mxu0 0
        %470 = vmatmul.mubr.bf16.gmra.mrb[0].mxu0 %v423
        %v471 = vpop.f32.mrb[0].mxu0
        %v472 = vadd.f32 %v408, %v471
        %v473 = vpop.f32.mrb[0].mxu0
        %v474 = vpop.f32.mrb[0].mxu0
        %v475 = vpop.f32.mrb[0].mxu0
        %476 = vdwg.mxu0
        %v477 = vmax.f32 %v464, 0.0
        %v478 = vmax.f32 %v467, 0.0
        %v479 = vmax.f32 %v472, 0.0
        %v480 = vmin.f32 %v477, 6.0
        %v481 = vmin.f32 %v478, 6.0
        %v482 = vmin.f32 %v479, 6.0
        %483 = vst [vmem:[#allocation2 + $0x8] sm:$0xff] %v480
        %484 = vst [vmem:[#allocation2 + $0x20] sm:$0xff] %v481
        %485 = vst [vmem:[#allocation2 + $0x38] sm:$0xff] %v482
        %v486 = vld [vmem:[%s386] sm:$0x3]
        %v487 = vld [vmem:[%s3] sm:$0xf]
        %v488 = vld [vmem:[%s3 + $0x4] sm:$0xf]
        %v489 = vld [vmem:[%s3 + $0x8] sm:$0xf]
        %v490 = vld [vmem:[%s4] sm:$0xff]
        %v491 = vld [vmem:[%s4 + $0x8] sm:$0xff]
        %v492 = vld [vmem:[%s4 + $0x10] sm:$0xff]
        %494 = vset.pattern.permute.xlu0 0
        %495 = vperm.xlu0 %494, %v490
        %v496 = vpop.permute.xlu0 %495
        %499 = vset.pattern.permute.xlu0 0
        %500 = vperm.xlu0 %499, %v491
        %v501 = vpop.permute.xlu0 %500
        %504 = vset.pattern.permute.xlu0 0
        %505 = vperm.xlu0 %504, %v492
        %v506 = vpop.permute.xlu0 %505
        %v511 = vunpack.c.l.b16 %v487
        %v512 = vunpack.c.l.b16 %v488
        %v513 = vunpack.c.l.b16 %v489
        %v514 = vpack.c.b16 %v512, %v511
        %v515 = vpack.c.b16 %v513, %v513
        %v517 = vsel %vm418, %v514, 0
        %v520 = vsel %vm418, %v515, 0
        %v523 = vsel %vm425, %v486, 0
        %525 = vmatprep.subr.bf16.mxu0 0
        %526 = vmatpush1.bf16.msra.mxu0 %v523
        %527 = vmatprep.subr.bf16.mxu0 0
        %528 = vmatpush1.bf16.msra.mxu0 0
        %529 = vmatprep.subr.bf16.mxu0 0
        %530 = vmatpush1.bf16.msra.mxu0 0
        %531 = vmatprep.subr.bf16.mxu0 0
        %532 = vmatpush1.bf16.msra.mxu0 0
        %533 = vmatprep.subr.bf16.mxu0 0
        %534 = vmatpush1.bf16.msra.mxu0 0
        %535 = vmatprep.subr.bf16.mxu0 0
        %536 = vmatpush1.bf16.msra.mxu0 0
        %537 = vmatprep.subr.bf16.mxu0 0
        %538 = vmatpush1.bf16.msra.mxu0 0
        %539 = vmatprep.subr.bf16.mxu0 0
        %540 = vmatpush1.bf16.msra.mxu0 0
        %541 = vmatprep.subr.bf16.mxu0 0
        %542 = vmatpush1.bf16.msra.mxu0 0
        %543 = vmatprep.subr.bf16.mxu0 0
        %544 = vmatpush1.bf16.msra.mxu0 0
        %545 = vmatprep.subr.bf16.mxu0 0
        %546 = vmatpush1.bf16.msra.mxu0 0
        %547 = vmatprep.subr.bf16.mxu0 0
        %548 = vmatpush1.bf16.msra.mxu0 0
        %549 = vmatprep.subr.bf16.mxu0 0
        %550 = vmatpush1.bf16.msra.mxu0 0
        %551 = vmatprep.subr.bf16.mxu0 0
        %552 = vmatpush1.bf16.msra.mxu0 0
        %553 = vmatprep.subr.bf16.mxu0 0
        %554 = vmatpush1.bf16.msra.mxu0 0
        %555 = vmatprep.subr.bf16.mxu0 0
        %556 = vmatpush1.bf16.msra.mxu0 0
        %557 = vmatprep.mubr.bf16.mxu0 0
        %558 = vmatmul.mubr.bf16.gmra.mrb[0].mxu0 %v517
        %v559 = vpop.f32.mrb[0].mxu0
        %v560 = vadd.f32 %v496, %v559
        %v561 = vpop.f32.mrb[0].mxu0
        %v562 = vpop.f32.mrb[0].mxu0
        %v563 = vadd.f32 %v501, %v562
        %v564 = vpop.f32.mrb[0].mxu0
        %565 = vmatprep.mubr.bf16.mxu0 0
        %566 = vmatmul.mubr.bf16.gmra.mrb[0].mxu0 %v520
        %v567 = vpop.f32.mrb[0].mxu0
        %v568 = vadd.f32 %v506, %v567
        %v569 = vpop.f32.mrb[0].mxu0
        %v570 = vpop.f32.mrb[0].mxu0
        %v571 = vpop.f32.mrb[0].mxu0
        %572 = vdwg.mxu0
        %v573 = vmax.f32 %v560, 0.0
        %v574 = vmax.f32 %v563, 0.0
        %v575 = vmax.f32 %v568, 0.0
        %v576 = vmin.f32 %v573, 6.0
        %v577 = vmin.f32 %v574, 6.0
        %v578 = vmin.f32 %v575, 6.0
        %p579 = scmp.gt.s32.totalorder %s28, 0
        %s580 = scalar_select %p579, 1, 0
        %s581 = scvt.s32.f32 %s580
        %p582 = scmp.lt.s32.totalorder %s28, 1
        %s583 = scalar_select %p582, 1, 0
        %s584 = scvt.s32.f32 %s583
        %v585 = vstv %s581
        %v586 = vmul.f32 %v576, %v585
        %v587 = vmul.f32 %v577, %v585
        %v588 = vmul.f32 %v578, %v585
        %592 = vrot.lane.b32.xlu0 %v586, 112
        %v593 = vpop.permute.xlu0 %592
        %594 = vrot.lane.b32.xlu0 %v587, 112
        %v595 = vpop.permute.xlu0 %594
        %596 = vrot.lane.b32.xlu0 %v588, 112
        %v597 = vpop.permute.xlu0 %596
        %vm601 = vcmask 1048448
        %602 = vst.msk [vmem:[#allocation2] sm:$0xff] %vm601, %v593
        %603 = vst.msk [vmem:[#allocation2 + $0x18] sm:$0xff] %vm601, %v595
        %604 = vst.msk [vmem:[#allocation2 + $0x30] sm:$0xff] %vm601, %v597
        %v605 = vstv %s584
        %v606 = vmul.f32 %v576, %v605
        %v607 = vmul.f32 %v577, %v605
        %v608 = vmul.f32 %v578, %v605
        %612 = vrot.lane.b32.xlu0 %v606, 112
        %v613 = vpop.permute.xlu0 %612
        %614 = vrot.lane.b32.xlu0 %v607, 112
        %v615 = vpop.permute.xlu0 %614
        %616 = vrot.lane.b32.xlu0 %v608, 112
        %v617 = vpop.permute.xlu0 %616
        %vm621 = vcmask 130048
        %622 = vst.msk [vmem:[#allocation2 + $0x10] sm:$0xff] %vm621, %v613
        %623 = vst.msk [vmem:[#allocation2 + $0x28] sm:$0xff] %vm621, %v615
        %624 = vst.msk [vmem:[#allocation2 + $0x40] sm:$0xff] %vm621, %v617
        %vm625 = vcmask 917368
        %626 = vst.msk [vmem:[#allocation2] sm:$0xff] %vm625, 0.0
        %627 = vst.msk [vmem:[#allocation2 + $0x18] sm:$0xff] %vm625, 0.0
        %628 = vst.msk [vmem:[#allocation2 + $0x30] sm:$0xff] %vm625, 0.0
        %vm629 = vcmask 138368
        %630 = vst.msk [vmem:[#allocation2 + $0x10] sm:$0xff] %vm629, 0.0
        %631 = vst.msk [vmem:[#allocation2 + $0x28] sm:$0xff] %vm629, 0.0
        %632 = vst.msk [vmem:[#allocation2 + $0x40] sm:$0xff] %vm629, 0.0
        %v633 = vld [vmem:[%s2] sm:$0x1]
        %v634 = vld [vmem:[%s2 + $0x1] sm:$0x1]
        %v635 = vld [vmem:[#allocation2] sm:$0xff]
        %v636 = vld [vmem:[#allocation2 + $0x8] sm:$0xff]
        %v637 = vld [vmem:[#allocation2 + $0x18] sm:$0xff]
        %v638 = vld [vmem:[#allocation2 + $0x20] sm:$0xff]
        %v639 = vld [vmem:[#allocation2 + $0x30] sm:$0xff]
        %v640 = vld [vmem:[#allocation2 + $0x38] sm:$0xff]
        %v641 = vld [vmem:[%s5] sm:$0xff]
        %v642 = vld [vmem:[%s5 + $0x8] sm:$0xff]
        %v643 = vld [vmem:[%s5 + $0x10] sm:$0xff]
        %645 = vset.pattern.permute.xlu0 1
        %646 = vperm.xlu0 %645, %v641
        %v647 = vpop.permute.xlu0 %646
        %650 = vset.pattern.permute.xlu0 1
        %651 = vperm.xlu0 %650, %v642
        %v652 = vpop.permute.xlu0 %651
        %655 = vset.pattern.permute.xlu0 1
        %656 = vperm.xlu0 %655, %v643
        %v657 = vpop.permute.xlu0 %656
        %v659 = vmul.f32 %v635, %v647
        %v660 = vmul.f32 %v636, %v647
        %v661 = vmul.f32 %v637, %v652
        %v662 = vmul.f32 %v638, %v652
        %v663 = vmul.f32 %v639, %v657
        %v664 = vmul.f32 %v640, %v657
        %665 = vset.pattern.permute.xlu0 4
        %666 = vperm.xlu0 %665, %v641
        %v667 = vpop.permute.xlu0 %666
        %669 = vset.pattern.permute.xlu0 4
        %670 = vperm.xlu0 %669, %v642
        %v671 = vpop.permute.xlu0 %670
        %673 = vset.pattern.permute.xlu0 4
        %674 = vperm.xlu0 %673, %v643
        %v675 = vpop.permute.xlu0 %674
        %v677 = vmul.f32 %v636, %v667
        %v678 = vmul.f32 %v638, %v671
        %v679 = vmul.f32 %v640, %v675
        %683 = vrot.lane.b32.xlu0 %v677, 112
        %v684 = vpop.permute.xlu0 %683
        %685 = vrot.lane.b32.xlu0 %v678, 112
        %v686 = vpop.permute.xlu0 %685
        %687 = vrot.lane.b32.xlu0 %v679, 112
        %v688 = vpop.permute.xlu0 %687
        %v692 = vadd.f32 %v659, %v684
        %v693 = vadd.f32 %v660, %v684
        %v694 = vadd.f32 %v661, %v686
        %v695 = vadd.f32 %v662, %v686
        %v696 = vadd.f32 %v663, %v688
        %v697 = vadd.f32 %v664, %v688
        %v698 = vld [vmem:[#allocation2 + $0x8] sm:$0xff]
        %v699 = vld [vmem:[#allocation2 + $0x10] sm:$0xff]
        %v700 = vld [vmem:[#allocation2 + $0x20] sm:$0xff]
        %v701 = vld [vmem:[#allocation2 + $0x28] sm:$0xff]
        %v702 = vld [vmem:[#allocation2 + $0x38] sm:$0xff]
        %v703 = vld [vmem:[#allocation2 + $0x40] sm:$0xff]
        %704 = vset.pattern.permute.xlu0 7
        %705 = vperm.xlu0 %704, %v641
        %v706 = vpop.permute.xlu0 %705
        %708 = vset.pattern.permute.xlu0 7
        %709 = vperm.xlu0 %708, %v642
        %v710 = vpop.permute.xlu0 %709
        %712 = vset.pattern.permute.xlu0 7
        %713 = vperm.xlu0 %712, %v643
        %v714 = vpop.permute.xlu0 %713
        %v716 = vmul.f32 %v698, %v706
        %v717 = vmul.f32 %v699, %v706
        %v718 = vmul.f32 %v700, %v710
        %v719 = vmul.f32 %v701, %v710
        %v720 = vmul.f32 %v702, %v714
        %v721 = vmul.f32 %v703, %v714
        %728 = vrot.lane.b32.xlu0 %v716, 96
        %v729 = vpop.permute.xlu0 %728
        %730 = vrot.lane.b32.xlu0 %v717, 96
        %v731 = vpop.permute.xlu0 %730
        %732 = vrot.lane.b32.xlu0 %v718, 96
        %v733 = vpop.permute.xlu0 %732
        %734 = vrot.lane.b32.xlu0 %v719, 96
        %v735 = vpop.permute.xlu0 %734
        %736 = vrot.lane.b32.xlu0 %v720, 96
        %v737 = vpop.permute.xlu0 %736
        %738 = vrot.lane.b32.xlu0 %v721, 96
        %v739 = vpop.permute.xlu0 %738
        %vm740 = vcmask 785408
        %v741 = vsel %vm740, %v729, %v731
        %v742 = vsel %vm740, %v733, %v735
        %v743 = vsel %vm740, %v737, %v739
        %v750 = vadd.f32 %v692, %v729
        %v751 = vadd.f32 %v693, %v741
        %v752 = vadd.f32 %v694, %v733
        %v753 = vadd.f32 %v695, %v742
        %v754 = vadd.f32 %v696, %v737
        %v755 = vadd.f32 %v697, %v743
        %756 = vset.pattern.permute.xlu0 0
        %757 = vperm.xlu0 %756, %v641
        %v758 = vpop.permute.xlu0 %757
        %760 = vset.pattern.permute.xlu0 0
        %761 = vperm.xlu0 %760, %v642
        %v762 = vpop.permute.xlu0 %761
        %764 = vset.pattern.permute.xlu0 0
        %765 = vperm.xlu0 %764, %v643
        %v766 = vpop.permute.xlu0 %765
        %v768 = vmul.f32 %v635, %v758
        %v769 = vmul.f32 %v636, %v758
        %v770 = vmul.f32 %v637, %v762
        %v771 = vmul.f32 %v638, %v762
        %v772 = vmul.f32 %v639, %v766
        %v773 = vmul.f32 %v640, %v766
        %774 = vset.pattern.permute.xlu0 3
        %775 = vperm.xlu0 %774, %v641
        %v776 = vpop.permute.xlu0 %775
        %778 = vset.pattern.permute.xlu0 3
        %779 = vperm.xlu0 %778, %v642
        %v780 = vpop.permute.xlu0 %779
        %782 = vset.pattern.permute.xlu0 3
        %783 = vperm.xlu0 %782, %v643
        %v784 = vpop.permute.xlu0 %783
        %v786 = vmul.f32 %v635, %v776
        %v787 = vmul.f32 %v636, %v776
        %v788 = vmul.f32 %v637, %v780
        %v789 = vmul.f32 %v638, %v780
        %v790 = vmul.f32 %v639, %v784
        %v791 = vmul.f32 %v640, %v784
        %798 = vrot.lane.b32.xlu0 %v786, 112
        %v799 = vpop.permute.xlu0 %798
        %800 = vrot.lane.b32.xlu0 %v787, 112
        %v801 = vpop.permute.xlu0 %800
        %802 = vrot.lane.b32.xlu0 %v788, 112
        %v803 = vpop.permute.xlu0 %802
        %804 = vrot.lane.b32.xlu0 %v789, 112
        %v805 = vpop.permute.xlu0 %804
        %806 = vrot.lane.b32.xlu0 %v790, 112
        %v807 = vpop.permute.xlu0 %806
        %808 = vrot.lane.b32.xlu0 %v791, 112
        %v809 = vpop.permute.xlu0 %808
        %vm810 = vcmask 916480
        %v811 = vsel %vm810, %v799, %v801
        %v812 = vsel %vm810, %v803, %v805
        %v813 = vsel %vm810, %v807, %v809
        %v820 = vadd.f32 %v768, %v811
        %v821 = vadd.f32 %v769, %v801
        %v822 = vadd.f32 %v770, %v812
        %v823 = vadd.f32 %v771, %v805
        %v824 = vadd.f32 %v772, %v813
        %v825 = vadd.f32 %v773, %v809
        %826 = vset.pattern.permute.xlu0 6
        %827 = vperm.xlu0 %826, %v641
        %v828 = vpop.permute.xlu0 %827
        %830 = vset.pattern.permute.xlu0 6
        %831 = vperm.xlu0 %830, %v642
        %v832 = vpop.permute.xlu0 %831
        %834 = vset.pattern.permute.xlu0 6
        %835 = vperm.xlu0 %834, %v643
        %v836 = vpop.permute.xlu0 %835
        %v838 = vmul.f32 %v698, %v828
        %v839 = vmul.f32 %v699, %v828
        %v840 = vmul.f32 %v700, %v832
        %v841 = vmul.f32 %v701, %v832
        %v842 = vmul.f32 %v702, %v836
        %v843 = vmul.f32 %v703, %v836
        %850 = vrot.lane.b32.xlu0 %v838, 96
        %v851 = vpop.permute.xlu0 %850
        %852 = vrot.lane.b32.xlu0 %v839, 96
        %v853 = vpop.permute.xlu0 %852
        %854 = vrot.lane.b32.xlu0 %v840, 96
        %v855 = vpop.permute.xlu0 %854
        %856 = vrot.lane.b32.xlu0 %v841, 96
        %v857 = vpop.permute.xlu0 %856
        %858 = vrot.lane.b32.xlu0 %v842, 96
        %v859 = vpop.permute.xlu0 %858
        %860 = vrot.lane.b32.xlu0 %v843, 96
        %v861 = vpop.permute.xlu0 %860
        %v862 = vsel %vm740, %v851, %v853
        %v863 = vsel %vm740, %v855, %v857
        %v864 = vsel %vm740, %v859, %v861
        %v871 = vadd.f32 %v820, %v851
        %v872 = vadd.f32 %v821, %v862
        %v873 = vadd.f32 %v822, %v855
        %v874 = vadd.f32 %v823, %v863
        %v875 = vadd.f32 %v824, %v859
        %v876 = vadd.f32 %v825, %v864
        %877 = vset.pattern.permute.xlu0 2
        %878 = vperm.xlu0 %877, %v641
        %v879 = vpop.permute.xlu0 %878
        %881 = vset.pattern.permute.xlu0 2
        %882 = vperm.xlu0 %881, %v642
        %v883 = vpop.permute.xlu0 %882
        %885 = vset.pattern.permute.xlu0 2
        %886 = vperm.xlu0 %885, %v643
        %v887 = vpop.permute.xlu0 %886
        %v889 = vmul.f32 %v635, %v879
        %v890 = vmul.f32 %v636, %v879
        %v891 = vmul.f32 %v637, %v883
        %v892 = vmul.f32 %v638, %v883
        %v893 = vmul.f32 %v639, %v887
        %v894 = vmul.f32 %v640, %v887
        %895 = vset.pattern.permute.xlu0 5
        %896 = vperm.xlu0 %895, %v641
        %v897 = vpop.permute.xlu0 %896
        %899 = vset.pattern.permute.xlu0 5
        %900 = vperm.xlu0 %899, %v642
        %v901 = vpop.permute.xlu0 %900
        %903 = vset.pattern.permute.xlu0 5
        %904 = vperm.xlu0 %903, %v643
        %v905 = vpop.permute.xlu0 %904
        %v907 = vmul.f32 %v698, %v897
        %v908 = vmul.f32 %v699, %v897
        %v909 = vmul.f32 %v700, %v901
        %v910 = vmul.f32 %v701, %v901
        %v911 = vmul.f32 %v702, %v905
        %v912 = vmul.f32 %v703, %v905
        %919 = vrot.lane.b32.xlu0 %v907, 112
        %v920 = vpop.permute.xlu0 %919
        %921 = vrot.lane.b32.xlu0 %v908, 112
        %v922 = vpop.permute.xlu0 %921
        %923 = vrot.lane.b32.xlu0 %v909, 112
        %v924 = vpop.permute.xlu0 %923
        %925 = vrot.lane.b32.xlu0 %v910, 112
        %v926 = vpop.permute.xlu0 %925
        %927 = vrot.lane.b32.xlu0 %v911, 112
        %v928 = vpop.permute.xlu0 %927
        %929 = vrot.lane.b32.xlu0 %v912, 112
        %v930 = vpop.permute.xlu0 %929
        %v931 = vsel %vm810, %v920, %v922
        %v932 = vsel %vm810, %v924, %v926
        %v933 = vsel %vm810, %v928, %v930
        %v940 = vadd.f32 %v889, %v920
        %v941 = vadd.f32 %v890, %v931
        %v942 = vadd.f32 %v891, %v924
        %v943 = vadd.f32 %v892, %v932
        %v944 = vadd.f32 %v893, %v928
        %v945 = vadd.f32 %v894, %v933
        %946 = vset.pattern.permute.xlu0 8
        %947 = vperm.xlu0 %946, %v641
        %v948 = vpop.permute.xlu0 %947
        %950 = vset.pattern.permute.xlu0 8
        %951 = vperm.xlu0 %950, %v642
        %v952 = vpop.permute.xlu0 %951
        %954 = vset.pattern.permute.xlu0 8
        %955 = vperm.xlu0 %954, %v643
        %v956 = vpop.permute.xlu0 %955
        %v958 = vmul.f32 %v698, %v948
        %v959 = vmul.f32 %v699, %v948
        %v960 = vmul.f32 %v700, %v952
        %v961 = vmul.f32 %v701, %v952
        %v962 = vmul.f32 %v702, %v956
        %v963 = vmul.f32 %v703, %v956
        %970 = vrot.lane.b32.xlu0 %v958, 96
        %v971 = vpop.permute.xlu0 %970
        %972 = vrot.lane.b32.xlu0 %v959, 96
        %v973 = vpop.permute.xlu0 %972
        %974 = vrot.lane.b32.xlu0 %v960, 96
        %v975 = vpop.permute.xlu0 %974
        %976 = vrot.lane.b32.xlu0 %v961, 96
        %v977 = vpop.permute.xlu0 %976
        %978 = vrot.lane.b32.xlu0 %v962, 96
        %v979 = vpop.permute.xlu0 %978
        %980 = vrot.lane.b32.xlu0 %v963, 96
        %v981 = vpop.permute.xlu0 %980
        %v982 = vsel %vm740, %v971, %v973
        %v983 = vsel %vm740, %v975, %v977
        %v984 = vsel %vm740, %v979, %v981
        %v991 = vadd.f32 %v940, %v971
        %v992 = vadd.f32 %v941, %v982
        %v993 = vadd.f32 %v942, %v975
        %v994 = vadd.f32 %v943, %v983
        %v995 = vadd.f32 %v944, %v979
        %v996 = vadd.f32 %v945, %v984
        %v997 = vlaneseq
        %v998 = vshrl.u32 %v997, 7
        %v999 = vsub.s32 0, %v998
        %v1000 = vrot.slane %v633, %v999
        %1002 = vrot.lane.b32.xlu0 %v1000, 111
        %v1003 = vpop.permute.xlu0 %1002
        %v1005 = vmul.f32 %v871, %v1003
        %v1006 = vmul.f32 %v872, %v1003
        %v1007 = vmul.f32 %v873, %v1003
        %v1008 = vmul.f32 %v874, %v1003
        %v1009 = vmul.f32 %v875, %v1003
        %v1010 = vmul.f32 %v876, %v1003
        %1017 = vrot.lane.b32.xlu0 %v1005, 1
        %v1018 = vpop.permute.xlu0 %1017
        %1019 = vrot.lane.b32.xlu0 %v1006, 1
        %v1020 = vpop.permute.xlu0 %1019
        %1021 = vrot.lane.b32.xlu0 %v1007, 1
        %v1022 = vpop.permute.xlu0 %1021
        %1023 = vrot.lane.b32.xlu0 %v1008, 1
        %v1024 = vpop.permute.xlu0 %1023
        %1025 = vrot.lane.b32.xlu0 %v1009, 1
        %v1026 = vpop.permute.xlu0 %1025
        %1027 = vrot.lane.b32.xlu0 %v1010, 1
        %v1028 = vpop.permute.xlu0 %1027
        %vm1029 = vcmask 7168
        %v1030 = vsel %vm1029, %v1018, %v1020
        %v1031 = vsel %vm1029, %v1022, %v1024
        %v1032 = vsel %vm1029, %v1026, %v1028
        %v1039 = vadd.f32 %v750, %v1018
        %v1040 = vadd.f32 %v751, %v1030
        %v1041 = vadd.f32 %v752, %v1022
        %v1042 = vadd.f32 %v753, %v1031
        %v1043 = vadd.f32 %v754, %v1026
        %v1044 = vadd.f32 %v755, %v1032
        %v1045 = vlaneseq
        %v1046 = vshrl.u32 %v1045, 7
        %v1047 = vsub.s32 0, %v1046
        %v1048 = vrot.slane %v634, %v1047
        %1050 = vrot.lane.b32.xlu0 %v1048, 113
        %v1051 = vpop.permute.xlu0 %1050
        %v1053 = vmul.f32 %v991, %v1051
        %v1054 = vmul.f32 %v992, %v1051
        %v1055 = vmul.f32 %v993, %v1051
        %v1056 = vmul.f32 %v994, %v1051
        %v1057 = vmul.f32 %v995, %v1051
        %v1058 = vmul.f32 %v996, %v1051
        %1065 = vrot.lane.b32.xlu0 %v1053, 127
        %v1066 = vpop.permute.xlu0 %1065
        %1067 = vrot.lane.b32.xlu0 %v1054, 127
        %v1068 = vpop.permute.xlu0 %1067
        %1069 = vrot.lane.b32.xlu0 %v1055, 127
        %v1070 = vpop.permute.xlu0 %1069
        %1071 = vrot.lane.b32.xlu0 %v1056, 127
        %v1072 = vpop.permute.xlu0 %1071
        %1073 = vrot.lane.b32.xlu0 %v1057, 127
        %v1074 = vpop.permute.xlu0 %1073
        %1075 = vrot.lane.b32.xlu0 %v1058, 127
        %v1076 = vpop.permute.xlu0 %1075
        %vm1077 = vcmask 1039360
        %v1078 = vsel %vm1077, %v1066, %v1068
        %v1079 = vsel %vm1077, %v1070, %v1072
        %v1080 = vsel %vm1077, %v1074, %v1076
        %v1087 = vadd.f32 %v1039, %v1078
        %v1088 = vadd.f32 %v1040, %v1068
        %v1089 = vadd.f32 %v1041, %v1079
        %v1090 = vadd.f32 %v1042, %v1072
        %v1091 = vadd.f32 %v1043, %v1080
        %v1092 = vadd.f32 %v1044, %v1076
        %v1093 = vld [vmem:[%s6] sm:$0xff]
        %v1094 = vld [vmem:[%s6 + $0x8] sm:$0xff]
        %v1095 = vld [vmem:[%s6 + $0x10] sm:$0xff]
        %1097 = vset.pattern.permute.xlu0 0
        %1098 = vperm.xlu0 %1097, %v1093
        %v1099 = vpop.permute.xlu0 %1098
        %1102 = vset.pattern.permute.xlu0 0
        %1103 = vperm.xlu0 %1102, %v1094
        %v1104 = vpop.permute.xlu0 %1103
        %1107 = vset.pattern.permute.xlu0 0
        %1108 = vperm.xlu0 %1107, %v1095
        %v1109 = vpop.permute.xlu0 %1108
        %v1111 = vadd.f32 %v1087, %v1099
        %v1112 = vadd.f32 %v1088, %v1099
        %v1113 = vadd.f32 %v1089, %v1104
        %v1114 = vadd.f32 %v1090, %v1104
        %v1115 = vadd.f32 %v1091, %v1109
        %v1116 = vadd.f32 %v1092, %v1109
        %v1117 = vmax.f32 %v1111, 0.0
        %v1118 = vmax.f32 %v1112, 0.0
        %v1119 = vmax.f32 %v1113, 0.0
        %v1120 = vmax.f32 %v1114, 0.0
        %v1121 = vmax.f32 %v1115, 0.0
        %v1122 = vmax.f32 %v1116, 0.0
        %v1123 = vmin.f32 %v1117, 6.0
        %v1124 = vmin.f32 %v1118, 6.0
        %v1125 = vmin.f32 %v1119, 6.0
        %v1126 = vmin.f32 %v1120, 6.0
        %v1127 = vmin.f32 %v1121, 6.0
        %v1128 = vmin.f32 %v1122, 6.0
        %v1129 = vld [vmem:[%s7] sm:$0x3]
        %v1130 = vpack.c.bf16 %v1125, %v1123
        %v1131 = vpack.c.bf16 %v1126, %v1124
        %v1132 = vpack.c.bf16 %v1127, %v1127
        %v1133 = vpack.c.bf16 %v1128, %v1128
        %v1134 = vld [vmem:[%s8] sm:$0xf]
        %1136 = vset.pattern.permute.xlu0 0
        %1137 = vperm.xlu0 %1136, %v1134
        %v1138 = vpop.permute.xlu0 %1137
        %1144 = vrot.lane.b32.xlu0 %v1130, 16
        %v1145 = vpop.permute.xlu0 %1144
        %1146 = vrot.lane.b32.xlu0 %v1131, 16
        %v1147 = vpop.permute.xlu0 %1146
        %1148 = vrot.lane.b32.xlu0 %v1132, 16
        %v1149 = vpop.permute.xlu0 %1148
        %1150 = vrot.lane.b32.xlu0 %v1133, 16
        %v1151 = vpop.permute.xlu0 %1150
        %vm1152 = vcmask 130048
        %v1153 = vsel %vm1152, %v1145, %v1147
        %v1154 = vsel %vm1152, %v1149, %v1151
        %vm1156 = vcmask 195584
        %v1158 = vsel %vm1156, %v1129, 0
        %vm1160 = vcmask 1043456
        %v1162 = vsel %vm1160, %v1154, 0
        %1164 = vmatprep.subr.bf16.mxu0 0
        %1165 = vmatpush1.bf16.msra.mxu0 %v1153
        %1166 = vmatprep.subr.bf16.mxu0 0
        %1167 = vmatpush1.bf16.msra.mxu0 %v1162
        %1168 = vmatprep.subr.bf16.mxu0 0
        %1169 = vmatpush1.bf16.msra.mxu0 0
        %1170 = vmatprep.subr.bf16.mxu0 0
        %1171 = vmatpush1.bf16.msra.mxu0 0
        %1172 = vmatprep.subr.bf16.mxu0 0
        %1173 = vmatpush1.bf16.msra.mxu0 0
        %1174 = vmatprep.subr.bf16.mxu0 0
        %1175 = vmatpush1.bf16.msra.mxu0 0
        %1176 = vmatprep.subr.bf16.mxu0 0
        %1177 = vmatpush1.bf16.msra.mxu0 0
        %1178 = vmatprep.subr.bf16.mxu0 0
        %1179 = vmatpush1.bf16.msra.mxu0 0
        %1180 = vmatprep.subr.bf16.mxu0 0
        %1181 = vmatpush1.bf16.msra.mxu0 0
        %1182 = vmatprep.subr.bf16.mxu0 0
        %1183 = vmatpush1.bf16.msra.mxu0 0
        %1184 = vmatprep.subr.bf16.mxu0 0
        %1185 = vmatpush1.bf16.msra.mxu0 0
        %1186 = vmatprep.subr.bf16.mxu0 0
        %1187 = vmatpush1.bf16.msra.mxu0 0
        %1188 = vmatprep.subr.bf16.mxu0 0
        %1189 = vmatpush1.bf16.msra.mxu0 0
        %1190 = vmatprep.subr.bf16.mxu0 0
        %1191 = vmatpush1.bf16.msra.mxu0 0
        %1192 = vmatprep.subr.bf16.mxu0 0
        %1193 = vmatpush1.bf16.msra.mxu0 0
        %1194 = vmatprep.subr.bf16.mxu0 0
        %1195 = vmatpush1.bf16.msra.mxu0 0
        %1196 = vmatprep.mubr.bf16.mxu0 0
        %1197 = vmatmul.mubr.bf16.gmra.mrb[0].mxu0 %v1158
        %v1198 = vpop.f32.mrb[0].mxu0
        %v1199 = vadd.f32 %v1138, %v1198
        %v1200 = vpop.f32.mrb[0].mxu0
        %v1201 = vpop.f32.mrb[0].mxu0
        %v1202 = vpop.f32.mrb[0].mxu0
        %1203 = vdwg.mxu0
        %v1204 = vunpack.c.l.bf16 %v388
        %v1205 = vadd.f32 %v1199, %v1204
        %v1206 = vpack.c.bf16 %v1205, %v1205
        %1207 = vst [vmem:[%s370] sm:$0x3] %v1206
        %s1208 = sand.u32 %s248, 1
        %s1209 = scalar_lea.sflag [#allocation4], %s1208
        %s1210 = sand.u32 %s248, 1
        %s1211 = smul.addr %s1210, 2
        %s1212 = scalar_lea.vmem [#allocation3], %s1211
        // Predicated region
        $region57: #{tpu_custom_call.1} parent=55 // pred_check
          %p1213 = pneg %p258
        $region58: #{tpu_custom_call.1} parent=55 // pred_check_branch
          %1215 = sbr.rel (%p1213) target = $region60
        $region59: #{tpu_custom_call.1} parent=55 // pred_region
          %s1217 = ssub.s32 32, 32
          %1218 = vsyncadd %s1209, %s1217
          %s1219 = smul.addr %s27, 2
          %s1220 = sadd.s32 %s28, %s1219
          %s1221 = smul.addr %s1220, 32
          %s1222 = scalar_lea.hbm %s9, %s1221
          %s1224 = sshll.u32 %s1212, 4
          %s1225 = int_to_ptr.vmem [resolvable:$true] %s1224
          %1227 = dma.vmem_to_hbm [thread:$0]  %s1225, 32, %s1222, %s1209
        $region60: #{tpu_custom_call.1} parent=55 // pred_fallthru
          _
      $region56: #{tpu_custom_call.1} parent=5 // pred_fallthru
        _
      %p1228 = scmp.le.s32.totalorder 2, %s18
      // Predicated region
      $region61: #{tpu_custom_call.1} parent=5 // pred_check
        %p1229 = pneg %p1228
      $region62: #{tpu_custom_call.1} parent=5 // pred_check_branch
        %1231 = sbr.rel (%p1229) target = $region64
      $region63: #{tpu_custom_call.1} parent=5 // pred_region
        %s1232 = ssub.s32 %s18, 2
        // Predicated region
        $region65: #{tpu_custom_call.1} parent=63 // pred_check
          %p1233 = pneg %p264
        $region66: #{tpu_custom_call.1} parent=63 // pred_check_branch
          %1235 = sbr.rel (%p1233) target = $region68
        $region67: #{tpu_custom_call.1} parent=63 // pred_region
          %s1236 = sand.u32 %s249, 1
          %s1237 = scalar_lea.sflag [#allocation4], %s1236
          %s1238 = sand.u32 %s249, 1
          %s1239 = smul.addr %s1238, 2
          %s1240 = scalar_lea.vmem [#allocation3], %s1239
          %1241 = dma.done %s1237, 32
        $region68: #{tpu_custom_call.1} parent=63 // pred_fallthru
          _
      $region64: #{tpu_custom_call.1} parent=5 // pred_fallthru
        _
    $region6: #{tpu_custom_call.1} parent=1 // loop_footer
      %s22 = sadd.s32 1, %s18
    $region7: #{tpu_custom_call.1} parent=1 // loop_footer_branch
      %17 = sbr.rel target = $region3
    $region8: #{tpu_custom_call.1} parent=1 // loop_exit
      _
    %1242 = vsyncpa [#allocation4], 1
    %s1243 = scalar_lea.sflag [#allocation4], 1
    %1244 = vsyncpa %s1243, 1

</llo_original>
